<compile_context>
chip_gen: v5e
topology: v5e:2x2
jax: 0.10.0
libtpu: 0.0.40
codegen_flags: <defaults>
</compile_context>

<pallas_src>
import jax
import jax.numpy as jnp
from jax.experimental import pallas as pl
from jax.experimental.pallas import tpu as pltpu

# ----------------------------- config (small) --------------------------------
B = 2                     # batch
S = 8                     # sequence length (pad_size)
H = 32                    # hidden_size
BS = B * S
FF = 64                   # BERT FFN intermediate size
NUM_FILTERS = 4           # config.num_filters
FILTER_SIZES = (2, 3, 4)  # config.filter_sizes
NUM_CLASSES = 3           # config.num_classes
VOCAB = 50
LANES = 128

_VMEM = pl.BlockSpec(memory_space=pltpu.MemorySpace.VMEM)


def _align8(n):
    return (n + 7) // 8 * 8


# --------------------- packed-parameter slab layout ---------------------------
# weight-matrix slab (W_ROWS, 128): every block starts on an 8-aligned row.
R_TOK = 0                                   # tok_emb        (VOCAB, H)
R_QKV = _align8(R_TOK + VOCAB)              # [wq|wk|wv]     (H, 3H)
R_WO = R_QKV + H                            # wo             (H, H)
R_W1 = R_WO + H                             # w1             (H, FF)
R_W2 = R_W1 + H                             # w2             (FF, H)
R_CW = []
_off = R_W2 + FF
for _k in FILTER_SIZES:                     # conv im2col weights (k*H, F)
    R_CW.append(_off)
    _off = _align8(_off + _k * H)
R_FC = _off                                 # fc weight (F*len(sizes), C) zero-padded to 128 cols
W_ROWS = _align8(R_FC + NUM_FILTERS * len(FILTER_SIZES))

# vector slab (V_ROWS, 128): one row per bias / LN param, zero padded.
V_EMB_G, V_EMB_B = 0, 1
V_BQKV = 2                                  # [bq|bk|bv] (1, 3H)
V_BO = 3
V_LN1G, V_LN1B = 4, 5
V_B1 = 6
V_B2 = 7
V_LN2G, V_LN2B = 8, 9
V_CB = (10, 11, 12)
V_FCB = 13                                  # (1, C) zero padded to 128
V_POS = 16                                  # pos_emb rows 16..16+S
V_ROWS = _align8(V_POS + S)


def _layer_norm(x, g, b, eps=1e-12):
    mu = jnp.mean(x, axis=-1, keepdims=True)
    var = jnp.mean((x - mu) ** 2, axis=-1, keepdims=True)
    return (x - mu) * jax.lax.rsqrt(var + eps) * g + b


# ------------------------- fused forward kernel ------------------------------
def fused_kernel(ids_ref, mask_ref, w_ref, v_ref, out_ref):
    f32 = jnp.float32

    # ---- embedding: one-hot gather as a matmul + embedding LayerNorm ----
    ids = ids_ref[...]                                              # (BS, 1) int32
    onehot = (ids == jax.lax.broadcasted_iota(jnp.int32, (BS, VOCAB), 1)).astype(f32)
    tok = w_ref[R_TOK:R_TOK + VOCAB, 0:H]                           # (VOCAB, H)
    pos = v_ref[V_POS:V_POS + S, 0:H]                               # (S, H)
    emb = jnp.dot(onehot, tok, preferred_element_type=f32) + jnp.tile(pos, (B, 1))
    x = _layer_norm(emb,
                    v_ref[V_EMB_G:V_EMB_G + 1, 0:H],
                    v_ref[V_EMB_B:V_EMB_B + 1, 0:H])                # (BS, H)

    # ---- single BERT encoder layer, activations flattened to (B*S, H) ----
    qkv = jnp.dot(x, w_ref[R_QKV:R_QKV + H, 0:3 * H],
                  preferred_element_type=f32) + v_ref[V_BQKV:V_BQKV + 1, 0:3 * H]
    q = qkv[:, 0:H].reshape(B, S, H)
    k = qkv[:, H:2 * H].reshape(B, S, H)
    v = qkv[:, 2 * H:3 * H].reshape(B, S, H)

    scale = 1.0 / jnp.sqrt(jnp.float32(H))
    att = jnp.einsum('bqh,bkh->bqk', q, k, preferred_element_type=f32) * scale
    m = mask_ref[...]                                               # (B, S) 0/1
    att = att + (1.0 - m)[:, None, :] * (-1e9)                      # attention_mask bias
    att = att - jnp.max(att, axis=-1, keepdims=True)
    p = jnp.exp(att)
    att = p * pl.reciprocal(jnp.sum(p, axis=-1, keepdims=True), approx=True)

    ctx = jnp.einsum('bqk,bkh->bqh', att, v,
                     preferred_element_type=f32).reshape(BS, H)
    attn_out = jnp.dot(ctx, w_ref[R_WO:R_WO + H, 0:H],
                       preferred_element_type=f32) + v_ref[V_BO:V_BO + 1, 0:H]
    h1 = _layer_norm(x + attn_out,
                     v_ref[V_LN1G:V_LN1G + 1, 0:H],
                     v_ref[V_LN1B:V_LN1B + 1, 0:H])

    ff = jnp.dot(h1, w_ref[R_W1:R_W1 + H, 0:FF],
                 preferred_element_type=f32) + v_ref[V_B1:V_B1 + 1, 0:FF]
    # TODO(synk): HuggingFace BERT uses exact (erf) gelu; tanh approximation here.
    ff = 0.5 * ff * (1.0 + jnp.tanh(0.7978845608028654 * (ff + 0.044715 * ff * ff * ff)))
    ff = jnp.dot(ff, w_ref[R_W2:R_W2 + FF, 0:H],
                 preferred_element_type=f32) + v_ref[V_B2:V_B2 + 1, 0:H]
    enc = _layer_norm(h1 + ff,
                      v_ref[V_LN2G:V_LN2G + 1, 0:H],
                      v_ref[V_LN2B:V_LN2B + 1, 0:H])                # (BS, H)
    encb = enc.reshape(B, S, H)

    # ---- conv(+relu) + maxpool + fc (accumulated partials, no concat) ----
    logits = jnp.zeros((B, LANES), f32) + v_ref[V_FCB:V_FCB + 1, :]  # fc bias (padded)
    for idx, ksz in enumerate(FILTER_SIZES):
        L = S - ksz + 1
        # im2col: one (B, L, k*H) x (k*H, F) matmul per filter size
        xwin = jnp.concatenate([encb[:, i:i + L, :] for i in range(ksz)], axis=-1)
        cw = w_ref[R_CW[idx]:R_CW[idx] + ksz * H, 0:NUM_FILTERS]    # (k*H, F)
        s = jnp.einsum('blh,hf->blf', xwin, cw,
                       preferred_element_type=f32) + v_ref[V_CB[idx]:V_CB[idx] + 1, 0:NUM_FILTERS]
        # relu(max_pool1d(.)) == max_pool1d(relu(.)) since relu is monotone
        pooled = jnp.maximum(jnp.max(s, axis=1), 0.0)               # (B, F)
        fcw_blk = w_ref[R_FC + idx * NUM_FILTERS:R_FC + (idx + 1) * NUM_FILTERS, :]  # (F, 128)
        logits = logits + jnp.dot(pooled, fcw_blk, preferred_element_type=f32)
    # dropout: inference mode -> identity
    out_ref[...] = logits                                           # lane-dense (B, 128)


# ------------------------------- wrapper --------------------------------------
def model_forward(x, wmat, vecs):
    context = x[0]                                  # (B, S) int32 token ids
    mask = x[2].astype(jnp.float32)                 # (B, S) attention mask
    ids = context.reshape(BS, 1).astype(jnp.int32)
    logits_padded = pl.pallas_call(
        fused_kernel,
        out_shape=jax.ShapeDtypeStruct((B, LANES), jnp.float32),
        in_specs=[_VMEM, _VMEM, _VMEM, _VMEM],
        out_specs=_VMEM,
    )(ids, mask, wmat, vecs)
    return logits_padded[:, :NUM_CLASSES]           # (B, num_classes)


# --------------------------- parameter packing --------------------------------
def _put(slab, row, arr):
    return slab.at[row:row + arr.shape[0], 0:arr.shape[1]].set(arr)


def pack_params(p):
    wmat = jnp.zeros((W_ROWS, LANES), jnp.float32)
    wmat = _put(wmat, R_TOK, p['tok_emb'])
    wmat = _put(wmat, R_QKV, jnp.concatenate([p['wq'], p['wk'], p['wv']], axis=1))
    wmat = _put(wmat, R_WO, p['wo'])
    wmat = _put(wmat, R_W1, p['w1'])
    wmat = _put(wmat, R_W2, p['w2'])
    for idx, ksz in enumerate(FILTER_SIZES):
        wmat = _put(wmat, R_CW[idx], p[f'cw{idx}'].reshape(ksz * H, NUM_FILTERS))
    wmat = _put(wmat, R_FC, p['fcw'])

    vecs = jnp.zeros((V_ROWS, LANES), jnp.float32)
    vecs = _put(vecs, V_EMB_G, p['emb_g'])
    vecs = _put(vecs, V_EMB_B, p['emb_b'])
    vecs = _put(vecs, V_BQKV, jnp.concatenate([p['bq'], p['bk'], p['bv']], axis=1))
    vecs = _put(vecs, V_BO, p['bo'])
    vecs = _put(vecs, V_LN1G, p['ln1g'])
    vecs = _put(vecs, V_LN1B, p['ln1b'])
    vecs = _put(vecs, V_B1, p['b1'])
    vecs = _put(vecs, V_B2, p['b2'])
    vecs = _put(vecs, V_LN2G, p['ln2g'])
    vecs = _put(vecs, V_LN2B, p['ln2b'])
    for idx in range(len(FILTER_SIZES)):
        vecs = _put(vecs, V_CB[idx], p[f'cb{idx}'])
    vecs = _put(vecs, V_FCB, p['fcb'])
    vecs = _put(vecs, V_POS, p['pos_emb'])
    return wmat, vecs


# ----------------------------- parameter init ----------------------------------
def init_params(key):
    ks = jax.random.split(key, 16)
    sc = 0.05
    p = {
        'tok_emb': sc * jax.random.normal(ks[0], (VOCAB, H), jnp.float32),
        'pos_emb': sc * jax.random.normal(ks[1], (S, H), jnp.float32),
        'emb_g': jnp.ones((1, H), jnp.float32),
        'emb_b': jnp.zeros((1, H), jnp.float32),
        'wq': sc * jax.random.normal(ks[2], (H, H), jnp.float32),
        'bq': jnp.zeros((1, H), jnp.float32),
        'wk': sc * jax.random.normal(ks[3], (H, H), jnp.float32),
        'bk': jnp.zeros((1, H), jnp.float32),
        'wv': sc * jax.random.normal(ks[4], (H, H), jnp.float32),
        'bv': jnp.zeros((1, H), jnp.float32),
        'wo': sc * jax.random.normal(ks[5], (H, H), jnp.float32),
        'bo': jnp.zeros((1, H), jnp.float32),
        'ln1g': jnp.ones((1, H), jnp.float32),
        'ln1b': jnp.zeros((1, H), jnp.float32),
        'w1': sc * jax.random.normal(ks[6], (H, FF), jnp.float32),
        'b1': jnp.zeros((1, FF), jnp.float32),
        'w2': sc * jax.random.normal(ks[7], (FF, H), jnp.float32),
        'b2': jnp.zeros((1, H), jnp.float32),
        'ln2g': jnp.ones((1, H), jnp.float32),
        'ln2b': jnp.zeros((1, H), jnp.float32),
    }
    # Conv2d(1, F, (k, H)) weights stored as (k, H, F) (PyTorch (F,1,k,H) transposed)
    for idx, (ksz, kk) in enumerate(zip(FILTER_SIZES, ks[8:11])):
        p[f'cw{idx}'] = sc * jax.random.normal(kk, (ksz, H, NUM_FILTERS), jnp.float32)
        p[f'cb{idx}'] = jnp.zeros((1, NUM_FILTERS), jnp.float32)
    # fc_cnn: Linear(F*len(filter_sizes), C); stored transposed as (in, C)
    p['fcw'] = sc * jax.random.normal(ks[11],
                                      (NUM_FILTERS * len(FILTER_SIZES), NUM_CLASSES),
                                      jnp.float32)
    p['fcb'] = jnp.zeros((1, NUM_CLASSES), jnp.float32)
    return p


if __name__ == "__main__":
    key = jax.random.PRNGKey(0)
    kp, kc = jax.random.split(key)
    params = init_params(kp)
    wmat, vecs = pack_params(params)   # pack tiny params into two lane-dense slabs (once)

    context = jax.random.randint(kc, (B, S), 0, VOCAB, dtype=jnp.int32)
    seq_len = jnp.full((B,), S, jnp.int32)
    # second example has 2 padding positions masked out
    mask = (jnp.arange(S)[None, :] < jnp.array([[S], [S - 2]])).astype(jnp.float32)
    x = (context, seq_len, mask)

    out = jax.jit(model_forward)(x, wmat, vecs)
    jax.block_until_ready(out)
    assert out.shape == (B, NUM_CLASSES)
    print("KERNEL_OK")
</pallas_src>

<mosaic_0001>
module attributes {stable_mosaic.version = 11 : i64} {
  func.func @fused_kernel(%arg0: memref<16x1xi32, #tpu.memory_space<vmem>>, %arg1: memref<2x8xf32, #tpu.memory_space<vmem>>, %arg2: memref<520x128xf32, #tpu.memory_space<vmem>>, %arg3: memref<24x128xf32, #tpu.memory_space<vmem>>, %arg4: memref<2x128xf32, #tpu.memory_space<vmem>>) attributes {dimension_semantics = [], scalar_prefetch = 0 : i64, scratch_operands = 0 : i64, tpu.core_type = #tpu.core_type<tc>} {
    %c0 = arith.constant 0 : index
    %c0_0 = arith.constant 0 : index
    %0 = vector.load %arg0[%c0, %c0_0] : memref<16x1xi32, #tpu.memory_space<vmem>>, vector<16x1xi32>
    %1 = tpu.iota {dimensions = array<i32: 1>} : vector<16x50xi32>
    %2 = vector.broadcast %0 : vector<16x1xi32> to vector<16x50xi32>
    %3 = arith.cmpi eq, %2, %1 : vector<16x50xi32>
    %4 = arith.extui %3 : vector<16x50xi1> to vector<16x50xi32>
    %5 = arith.sitofp %4 : vector<16x50xi32> to vector<16x50xf32>
    %c0_1 = arith.constant 0 : index
    %c0_2 = arith.constant 0 : index
    %6 = vector.load %arg2[%c0_1, %c0_2] : memref<520x128xf32, #tpu.memory_space<vmem>>, vector<50x32xf32>
    %c16 = arith.constant 16 : index
    %c0_3 = arith.constant 0 : index
    %7 = vector.load %arg3[%c16, %c0_3] : memref<24x128xf32, #tpu.memory_space<vmem>>, vector<8x32xf32>
    %cst = arith.constant dense<0.000000e+00> : vector<16x32xf32>
    %8 = tpu.matmul %5, %6, %cst {dimension_numbers = #tpu.dot_dimension_numbers<[1], [0], [0], [1], [0, 0, 1, 1], [], []>} : vector<16x50xf32>, vector<50x32xf32>, vector<16x32xf32> -> vector<16x32xf32>
    %9 = tpu.concatenate %7, %7 in 0 : vector<8x32xf32>, vector<8x32xf32> -> vector<16x32xf32>
    %10 = arith.addf %8, %9 : vector<16x32xf32>
    %c0_4 = arith.constant 0 : index
    %c0_5 = arith.constant 0 : index
    %11 = vector.load %arg3[%c0_4, %c0_5] : memref<24x128xf32, #tpu.memory_space<vmem>>, vector<1x32xf32>
    %c1 = arith.constant 1 : index
    %c0_6 = arith.constant 0 : index
    %12 = vector.load %arg3[%c1, %c0_6] : memref<24x128xf32, #tpu.memory_space<vmem>>, vector<1x32xf32>
    %cst_7 = arith.constant dense<0.000000e+00> : vector<16xf32>
    %13 = vector.multi_reduction <add>, %10, %cst_7 [1] : vector<16x32xf32> to vector<16xf32>
    %14 = vector.shape_cast %13 : vector<16xf32> to vector<16x1xf32>
    %cst_8 = arith.constant 3.200000e+01 : f32
    %15 = vector.broadcast %cst_8 : f32 to vector<16x1xf32>
    %16 = arith.divf %14, %15 : vector<16x1xf32>
    %17 = vector.broadcast %16 : vector<16x1xf32> to vector<16x32xf32>
    %18 = arith.subf %10, %17 : vector<16x32xf32>
    %19 = arith.mulf %18, %18 : vector<16x32xf32>
    %cst_9 = arith.constant dense<0.000000e+00> : vector<16xf32>
    %20 = vector.multi_reduction <add>, %19, %cst_9 [1] : vector<16x32xf32> to vector<16xf32>
    %21 = vector.shape_cast %20 : vector<16xf32> to vector<16x1xf32>
    %cst_10 = arith.constant 3.200000e+01 : f32
    %22 = vector.broadcast %cst_10 : f32 to vector<16x1xf32>
    %23 = arith.divf %21, %22 : vector<16x1xf32>
    %24 = vector.broadcast %16 : vector<16x1xf32> to vector<16x32xf32>
    %25 = arith.subf %10, %24 : vector<16x32xf32>
    %cst_11 = arith.constant 9.99999996E-13 : f32
    %26 = vector.broadcast %cst_11 : f32 to vector<16x1xf32>
    %27 = arith.addf %23, %26 : vector<16x1xf32>
    %28 = math.rsqrt %27 : vector<16x1xf32>
    %29 = vector.broadcast %28 : vector<16x1xf32> to vector<16x32xf32>
    %30 = arith.mulf %25, %29 : vector<16x32xf32>
    %31 = vector.broadcast %11 : vector<1x32xf32> to vector<16x32xf32>
    %32 = arith.mulf %30, %31 : vector<16x32xf32>
    %33 = vector.broadcast %12 : vector<1x32xf32> to vector<16x32xf32>
    %34 = arith.addf %32, %33 : vector<16x32xf32>
    %c56 = arith.constant 56 : index
    %c0_12 = arith.constant 0 : index
    %35 = vector.load %arg2[%c56, %c0_12] : memref<520x128xf32, #tpu.memory_space<vmem>>, vector<32x96xf32>
    %cst_13 = arith.constant dense<0.000000e+00> : vector<16x96xf32>
    %36 = tpu.matmul %34, %35, %cst_13 {dimension_numbers = #tpu.dot_dimension_numbers<[1], [0], [0], [1], [0, 0, 1, 1], [], []>} : vector<16x32xf32>, vector<32x96xf32>, vector<16x96xf32> -> vector<16x96xf32>
    %c2 = arith.constant 2 : index
    %c0_14 = arith.constant 0 : index
    %37 = vector.load %arg3[%c2, %c0_14] : memref<24x128xf32, #tpu.memory_space<vmem>>, vector<1x96xf32>
    %38 = vector.broadcast %37 : vector<1x96xf32> to vector<16x96xf32>
    %39 = arith.addf %36, %38 : vector<16x96xf32>
    %40 = vector.extract_strided_slice %39 {offsets = [0, 0], sizes = [16, 32], strides = [1, 1]} : vector<16x96xf32> to vector<16x32xf32>
    %41 = vector.shape_cast %40 : vector<16x32xf32> to vector<2x8x32xf32>
    %42 = vector.extract_strided_slice %39 {offsets = [0, 32], sizes = [16, 32], strides = [1, 1]} : vector<16x96xf32> to vector<16x32xf32>
    %43 = vector.shape_cast %42 : vector<16x32xf32> to vector<2x8x32xf32>
    %44 = vector.extract_strided_slice %39 {offsets = [0, 64], sizes = [16, 32], strides = [1, 1]} : vector<16x96xf32> to vector<16x32xf32>
    %45 = vector.shape_cast %44 : vector<16x32xf32> to vector<2x8x32xf32>
    %cst_15 = arith.constant 3.200000e+01 : f32
    %46 = math.sqrt %cst_15 : f32
    %cst_16 = arith.constant 1.000000e+00 : f32
    %47 = arith.divf %cst_16, %46 : f32
    "tpu.trace_start"() <{level = 10 : i32, message = "bqh,bkh->bqk"}> : () -> ()
    %cst_17 = arith.constant dense<0.000000e+00> : vector<2x8x8xf32>
    %48 = tpu.matmul %41, %43, %cst_17 {dimension_numbers = #tpu.dot_dimension_numbers<[2], [2], [1], [1], [0, 0, 0, 1, 1, 1], [0], [0]>} : vector<2x8x32xf32>, vector<2x8x32xf32>, vector<2x8x8xf32> -> vector<2x8x8xf32>
    "tpu.trace_stop"() : () -> ()
    %49 = vector.broadcast %47 : f32 to vector<2x8x8xf32>
    %50 = arith.mulf %48, %49 : vector<2x8x8xf32>
    %c0_18 = arith.constant 0 : index
    %c0_19 = arith.constant 0 : index
    %51 = vector.load %arg1[%c0_18, %c0_19] : memref<2x8xf32, #tpu.memory_space<vmem>>, vector<2x8xf32>
    %cst_20 = arith.constant 1.000000e+00 : f32
    %52 = vector.broadcast %cst_20 : f32 to vector<2x8xf32>
    %53 = arith.subf %52, %51 : vector<2x8xf32>
    %54 = vector.shape_cast %53 : vector<2x8xf32> to vector<2x1x8xf32>
    %cst_21 = arith.constant -1.000000e+09 : f32
    %55 = vector.broadcast %cst_21 : f32 to vector<2x1x8xf32>
    %56 = arith.mulf %54, %55 : vector<2x1x8xf32>
    %57 = vector.broadcast %56 : vector<2x1x8xf32> to vector<2x8x8xf32>
    %58 = arith.addf %50, %57 : vector<2x8x8xf32>
    %cst_22 = arith.constant dense<0xFF800000> : vector<2x8xf32>
    %59 = vector.multi_reduction <maximumf>, %58, %cst_22 [2] : vector<2x8x8xf32> to vector<2x8xf32>
    %60 = vector.shape_cast %59 : vector<2x8xf32> to vector<2x8x1xf32>
    %61 = vector.broadcast %60 : vector<2x8x1xf32> to vector<2x8x8xf32>
    %62 = arith.subf %58, %61 : vector<2x8x8xf32>
    %63 = math.exp %62 : vector<2x8x8xf32>
    %cst_23 = arith.constant dense<0.000000e+00> : vector<2x8xf32>
    %64 = vector.multi_reduction <add>, %63, %cst_23 [2] : vector<2x8x8xf32> to vector<2x8xf32>
    %65 = vector.shape_cast %64 : vector<2x8xf32> to vector<2x8x1xf32>
    %66 = tpu.reciprocal %65 {approx = true} : vector<2x8x1xf32> -> vector<2x8x1xf32>
    %67 = vector.broadcast %66 : vector<2x8x1xf32> to vector<2x8x8xf32>
    %68 = arith.mulf %63, %67 : vector<2x8x8xf32>
    "tpu.trace_start"() <{level = 10 : i32, message = "bqk,bkh->bqh"}> : () -> ()
    %cst_24 = arith.constant dense<0.000000e+00> : vector<2x8x32xf32>
    %69 = tpu.matmul %68, %45, %cst_24 {dimension_numbers = #tpu.dot_dimension_numbers<[2], [1], [1], [2], [0, 0, 0, 1, 1, 2], [0], [0]>} : vector<2x8x8xf32>, vector<2x8x32xf32>, vector<2x8x32xf32> -> vector<2x8x32xf32>
    "tpu.trace_stop"() : () -> ()
    %70 = vector.shape_cast %69 : vector<2x8x32xf32> to vector<16x32xf32>
    %c88 = arith.constant 88 : index
    %c0_25 = arith.constant 0 : index
    %71 = vector.load %arg2[%c88, %c0_25] : memref<520x128xf32, #tpu.memory_space<vmem>>, vector<32x32xf32>
    %cst_26 = arith.constant dense<0.000000e+00> : vector<16x32xf32>
    %72 = tpu.matmul %70, %71, %cst_26 {dimension_numbers = #tpu.dot_dimension_numbers<[1], [0], [0], [1], [0, 0, 1, 1], [], []>} : vector<16x32xf32>, vector<32x32xf32>, vector<16x32xf32> -> vector<16x32xf32>
    %c3 = arith.constant 3 : index
    %c0_27 = arith.constant 0 : index
    %73 = vector.load %arg3[%c3, %c0_27] : memref<24x128xf32, #tpu.memory_space<vmem>>, vector<1x32xf32>
    %74 = vector.broadcast %73 : vector<1x32xf32> to vector<16x32xf32>
    %75 = arith.addf %72, %74 : vector<16x32xf32>
    %76 = arith.addf %34, %75 : vector<16x32xf32>
    %c4 = arith.constant 4 : index
    %c0_28 = arith.constant 0 : index
    %77 = vector.load %arg3[%c4, %c0_28] : memref<24x128xf32, #tpu.memory_space<vmem>>, vector<1x32xf32>
    %c5 = arith.constant 5 : index
    %c0_29 = arith.constant 0 : index
    %78 = vector.load %arg3[%c5, %c0_29] : memref<24x128xf32, #tpu.memory_space<vmem>>, vector<1x32xf32>
    %cst_30 = arith.constant dense<0.000000e+00> : vector<16xf32>
    %79 = vector.multi_reduction <add>, %76, %cst_30 [1] : vector<16x32xf32> to vector<16xf32>
    %80 = vector.shape_cast %79 : vector<16xf32> to vector<16x1xf32>
    %cst_31 = arith.constant 3.200000e+01 : f32
    %81 = vector.broadcast %cst_31 : f32 to vector<16x1xf32>
    %82 = arith.divf %80, %81 : vector<16x1xf32>
    %83 = vector.broadcast %82 : vector<16x1xf32> to vector<16x32xf32>
    %84 = arith.subf %76, %83 : vector<16x32xf32>
    %85 = arith.mulf %84, %84 : vector<16x32xf32>
    %cst_32 = arith.constant dense<0.000000e+00> : vector<16xf32>
    %86 = vector.multi_reduction <add>, %85, %cst_32 [1] : vector<16x32xf32> to vector<16xf32>
    %87 = vector.shape_cast %86 : vector<16xf32> to vector<16x1xf32>
    %cst_33 = arith.constant 3.200000e+01 : f32
    %88 = vector.broadcast %cst_33 : f32 to vector<16x1xf32>
    %89 = arith.divf %87, %88 : vector<16x1xf32>
    %90 = vector.broadcast %82 : vector<16x1xf32> to vector<16x32xf32>
    %91 = arith.subf %76, %90 : vector<16x32xf32>
    %cst_34 = arith.constant 9.99999996E-13 : f32
    %92 = vector.broadcast %cst_34 : f32 to vector<16x1xf32>
    %93 = arith.addf %89, %92 : vector<16x1xf32>
    %94 = math.rsqrt %93 : vector<16x1xf32>
    %95 = vector.broadcast %94 : vector<16x1xf32> to vector<16x32xf32>
    %96 = arith.mulf %91, %95 : vector<16x32xf32>
    %97 = vector.broadcast %77 : vector<1x32xf32> to vector<16x32xf32>
    %98 = arith.mulf %96, %97 : vector<16x32xf32>
    %99 = vector.broadcast %78 : vector<1x32xf32> to vector<16x32xf32>
    %100 = arith.addf %98, %99 : vector<16x32xf32>
    %c120 = arith.constant 120 : index
    %c0_35 = arith.constant 0 : index
    %101 = vector.load %arg2[%c120, %c0_35] : memref<520x128xf32, #tpu.memory_space<vmem>>, vector<32x64xf32>
    %cst_36 = arith.constant dense<0.000000e+00> : vector<16x64xf32>
    %102 = tpu.matmul %100, %101, %cst_36 {dimension_numbers = #tpu.dot_dimension_numbers<[1], [0], [0], [1], [0, 0, 1, 1], [], []>} : vector<16x32xf32>, vector<32x64xf32>, vector<16x64xf32> -> vector<16x64xf32>
    %c6 = arith.constant 6 : index
    %c0_37 = arith.constant 0 : index
    %103 = vector.load %arg3[%c6, %c0_37] : memref<24x128xf32, #tpu.memory_space<vmem>>, vector<1x64xf32>
    %104 = vector.broadcast %103 : vector<1x64xf32> to vector<16x64xf32>
    %105 = arith.addf %102, %104 : vector<16x64xf32>
    %cst_38 = arith.constant 5.000000e-01 : f32
    %106 = vector.broadcast %cst_38 : f32 to vector<16x64xf32>
    %107 = arith.mulf %106, %105 : vector<16x64xf32>
    %cst_39 = arith.constant 4.471500e-02 : f32
    %108 = vector.broadcast %cst_39 : f32 to vector<16x64xf32>
    %109 = arith.mulf %108, %105 : vector<16x64xf32>
    %110 = arith.mulf %109, %105 : vector<16x64xf32>
    %111 = arith.mulf %110, %105 : vector<16x64xf32>
    %112 = arith.addf %105, %111 : vector<16x64xf32>
    %cst_40 = arith.constant 0.797884583 : f32
    %113 = vector.broadcast %cst_40 : f32 to vector<16x64xf32>
    %114 = arith.mulf %113, %112 : vector<16x64xf32>
    %115 = math.tanh %114 : vector<16x64xf32>
    %cst_41 = arith.constant 1.000000e+00 : f32
    %116 = vector.broadcast %cst_41 : f32 to vector<16x64xf32>
    %117 = arith.addf %116, %115 : vector<16x64xf32>
    %118 = arith.mulf %107, %117 : vector<16x64xf32>
    %c152 = arith.constant 152 : index
    %c0_42 = arith.constant 0 : index
    %119 = vector.load %arg2[%c152, %c0_42] : memref<520x128xf32, #tpu.memory_space<vmem>>, vector<64x32xf32>
    %cst_43 = arith.constant dense<0.000000e+00> : vector<16x32xf32>
    %120 = tpu.matmul %118, %119, %cst_43 {dimension_numbers = #tpu.dot_dimension_numbers<[1], [0], [0], [1], [0, 0, 1, 1], [], []>} : vector<16x64xf32>, vector<64x32xf32>, vector<16x32xf32> -> vector<16x32xf32>
    %c7 = arith.constant 7 : index
    %c0_44 = arith.constant 0 : index
    %121 = vector.load %arg3[%c7, %c0_44] : memref<24x128xf32, #tpu.memory_space<vmem>>, vector<1x32xf32>
    %122 = vector.broadcast %121 : vector<1x32xf32> to vector<16x32xf32>
    %123 = arith.addf %120, %122 : vector<16x32xf32>
    %124 = arith.addf %100, %123 : vector<16x32xf32>
    %c8 = arith.constant 8 : index
    %c0_45 = arith.constant 0 : index
    %125 = vector.load %arg3[%c8, %c0_45] : memref<24x128xf32, #tpu.memory_space<vmem>>, vector<1x32xf32>
    %c9 = arith.constant 9 : index
    %c0_46 = arith.constant 0 : index
    %126 = vector.load %arg3[%c9, %c0_46] : memref<24x128xf32, #tpu.memory_space<vmem>>, vector<1x32xf32>
    %cst_47 = arith.constant dense<0.000000e+00> : vector<16xf32>
    %127 = vector.multi_reduction <add>, %124, %cst_47 [1] : vector<16x32xf32> to vector<16xf32>
    %128 = vector.shape_cast %127 : vector<16xf32> to vector<16x1xf32>
    %cst_48 = arith.constant 3.200000e+01 : f32
    %129 = vector.broadcast %cst_48 : f32 to vector<16x1xf32>
    %130 = arith.divf %128, %129 : vector<16x1xf32>
    %131 = vector.broadcast %130 : vector<16x1xf32> to vector<16x32xf32>
    %132 = arith.subf %124, %131 : vector<16x32xf32>
    %133 = arith.mulf %132, %132 : vector<16x32xf32>
    %cst_49 = arith.constant dense<0.000000e+00> : vector<16xf32>
    %134 = vector.multi_reduction <add>, %133, %cst_49 [1] : vector<16x32xf32> to vector<16xf32>
    %135 = vector.shape_cast %134 : vector<16xf32> to vector<16x1xf32>
    %cst_50 = arith.constant 3.200000e+01 : f32
    %136 = vector.broadcast %cst_50 : f32 to vector<16x1xf32>
    %137 = arith.divf %135, %136 : vector<16x1xf32>
    %138 = vector.broadcast %130 : vector<16x1xf32> to vector<16x32xf32>
    %139 = arith.subf %124, %138 : vector<16x32xf32>
    %cst_51 = arith.constant 9.99999996E-13 : f32
    %140 = vector.broadcast %cst_51 : f32 to vector<16x1xf32>
    %141 = arith.addf %137, %140 : vector<16x1xf32>
    %142 = math.rsqrt %141 : vector<16x1xf32>
    %143 = vector.broadcast %142 : vector<16x1xf32> to vector<16x32xf32>
    %144 = arith.mulf %139, %143 : vector<16x32xf32>
    %145 = vector.broadcast %125 : vector<1x32xf32> to vector<16x32xf32>
    %146 = arith.mulf %144, %145 : vector<16x32xf32>
    %147 = vector.broadcast %126 : vector<1x32xf32> to vector<16x32xf32>
    %148 = arith.addf %146, %147 : vector<16x32xf32>
    %149 = vector.shape_cast %148 : vector<16x32xf32> to vector<2x8x32xf32>
    %cst_52 = arith.constant 0.000000e+00 : f32
    %150 = vector.broadcast %cst_52 : f32 to vector<2x128xf32>
    %c13 = arith.constant 13 : index
    %c0_53 = arith.constant 0 : index
    %151 = vector.load %arg3[%c13, %c0_53] : memref<24x128xf32, #tpu.memory_space<vmem>>, vector<1x128xf32>
    %152 = vector.broadcast %151 : vector<1x128xf32> to vector<2x128xf32>
    %153 = arith.addf %150, %152 : vector<2x128xf32>
    %154 = vector.extract_strided_slice %149 {offsets = [0, 0, 0], sizes = [2, 7, 32], strides = [1, 1, 1]} : vector<2x8x32xf32> to vector<2x7x32xf32>
    %155 = vector.extract_strided_slice %149 {offsets = [0, 1, 0], sizes = [2, 7, 32], strides = [1, 1, 1]} : vector<2x8x32xf32> to vector<2x7x32xf32>
    %156 = tpu.concatenate %154, %155 in 2 : vector<2x7x32xf32>, vector<2x7x32xf32> -> vector<2x7x64xf32>
    %c216 = arith.constant 216 : index
    %c0_54 = arith.constant 0 : index
    %157 = vector.load %arg2[%c216, %c0_54] : memref<520x128xf32, #tpu.memory_space<vmem>>, vector<64x4xf32>
    "tpu.trace_start"() <{level = 10 : i32, message = "blh,hf->blf"}> : () -> ()
    %cst_55 = arith.constant dense<0.000000e+00> : vector<2x7x4xf32>
    %158 = tpu.matmul %156, %157, %cst_55 {dimension_numbers = #tpu.dot_dimension_numbers<[2], [0], [0, 1], [1], [0, 0, 0, 1, 1, 1], [], []>} : vector<2x7x64xf32>, vector<64x4xf32>, vector<2x7x4xf32> -> vector<2x7x4xf32>
    "tpu.trace_stop"() : () -> ()
    %c10 = arith.constant 10 : index
    %c0_56 = arith.constant 0 : index
    %159 = vector.load %arg3[%c10, %c0_56] : memref<24x128xf32, #tpu.memory_space<vmem>>, vector<1x4xf32>
    %160 = vector.shape_cast %159 : vector<1x4xf32> to vector<1x1x4xf32>
    %161 = vector.broadcast %160 : vector<1x1x4xf32> to vector<2x7x4xf32>
    %162 = arith.addf %158, %161 : vector<2x7x4xf32>
    %cst_57 = arith.constant dense<0xFF800000> : vector<2x4xf32>
    %163 = vector.multi_reduction <maximumf>, %162, %cst_57 [1] : vector<2x7x4xf32> to vector<2x4xf32>
    %cst_58 = arith.constant 0.000000e+00 : f32
    %164 = vector.broadcast %cst_58 : f32 to vector<2x4xf32>
    %165 = arith.maximumf %163, %164 : vector<2x4xf32>
    %c504 = arith.constant 504 : index
    %c0_59 = arith.constant 0 : index
    %166 = vector.load %arg2[%c504, %c0_59] : memref<520x128xf32, #tpu.memory_space<vmem>>, vector<4x128xf32>
    %cst_60 = arith.constant dense<0.000000e+00> : vector<2x128xf32>
    %167 = tpu.matmul %165, %166, %cst_60 {dimension_numbers = #tpu.dot_dimension_numbers<[1], [0], [0], [1], [0, 0, 1, 1], [], []>} : vector<2x4xf32>, vector<4x128xf32>, vector<2x128xf32> -> vector<2x128xf32>
    %168 = arith.addf %153, %167 : vector<2x128xf32>
    %169 = vector.extract_strided_slice %149 {offsets = [0, 0, 0], sizes = [2, 6, 32], strides = [1, 1, 1]} : vector<2x8x32xf32> to vector<2x6x32xf32>
    %170 = vector.extract_strided_slice %149 {offsets = [0, 1, 0], sizes = [2, 6, 32], strides = [1, 1, 1]} : vector<2x8x32xf32> to vector<2x6x32xf32>
    %171 = vector.extract_strided_slice %149 {offsets = [0, 2, 0], sizes = [2, 6, 32], strides = [1, 1, 1]} : vector<2x8x32xf32> to vector<2x6x32xf32>
    %172 = tpu.concatenate %169, %170, %171 in 2 : vector<2x6x32xf32>, vector<2x6x32xf32>, vector<2x6x32xf32> -> vector<2x6x96xf32>
    %c280 = arith.constant 280 : index
    %c0_61 = arith.constant 0 : index
    %173 = vector.load %arg2[%c280, %c0_61] : memref<520x128xf32, #tpu.memory_space<vmem>>, vector<96x4xf32>
    "tpu.trace_start"() <{level = 10 : i32, message = "blh,hf->blf"}> : () -> ()
    %cst_62 = arith.constant dense<0.000000e+00> : vector<2x6x4xf32>
    %174 = tpu.matmul %172, %173, %cst_62 {dimension_numbers = #tpu.dot_dimension_numbers<[2], [0], [0, 1], [1], [0, 0, 0, 1, 1, 1], [], []>} : vector<2x6x96xf32>, vector<96x4xf32>, vector<2x6x4xf32> -> vector<2x6x4xf32>
    "tpu.trace_stop"() : () -> ()
    %c11 = arith.constant 11 : index
    %c0_63 = arith.constant 0 : index
    %175 = vector.load %arg3[%c11, %c0_63] : memref<24x128xf32, #tpu.memory_space<vmem>>, vector<1x4xf32>
    %176 = vector.shape_cast %175 : vector<1x4xf32> to vector<1x1x4xf32>
    %177 = vector.broadcast %176 : vector<1x1x4xf32> to vector<2x6x4xf32>
    %178 = arith.addf %174, %177 : vector<2x6x4xf32>
    %cst_64 = arith.constant dense<0xFF800000> : vector<2x4xf32>
    %179 = vector.multi_reduction <maximumf>, %178, %cst_64 [1] : vector<2x6x4xf32> to vector<2x4xf32>
    %cst_65 = arith.constant 0.000000e+00 : f32
    %180 = vector.broadcast %cst_65 : f32 to vector<2x4xf32>
    %181 = arith.maximumf %179, %180 : vector<2x4xf32>
    %c508 = arith.constant 508 : index
    %c0_66 = arith.constant 0 : index
    %182 = vector.load %arg2[%c508, %c0_66] : memref<520x128xf32, #tpu.memory_space<vmem>>, vector<4x128xf32>
    %cst_67 = arith.constant dense<0.000000e+00> : vector<2x128xf32>
    %183 = tpu.matmul %181, %182, %cst_67 {dimension_numbers = #tpu.dot_dimension_numbers<[1], [0], [0], [1], [0, 0, 1, 1], [], []>} : vector<2x4xf32>, vector<4x128xf32>, vector<2x128xf32> -> vector<2x128xf32>
    %184 = arith.addf %168, %183 : vector<2x128xf32>
    %185 = vector.extract_strided_slice %149 {offsets = [0, 0, 0], sizes = [2, 5, 32], strides = [1, 1, 1]} : vector<2x8x32xf32> to vector<2x5x32xf32>
    %186 = vector.extract_strided_slice %149 {offsets = [0, 1, 0], sizes = [2, 5, 32], strides = [1, 1, 1]} : vector<2x8x32xf32> to vector<2x5x32xf32>
    %187 = vector.extract_strided_slice %149 {offsets = [0, 2, 0], sizes = [2, 5, 32], strides = [1, 1, 1]} : vector<2x8x32xf32> to vector<2x5x32xf32>
    %188 = vector.extract_strided_slice %149 {offsets = [0, 3, 0], sizes = [2, 5, 32], strides = [1, 1, 1]} : vector<2x8x32xf32> to vector<2x5x32xf32>
    %189 = tpu.concatenate %185, %186, %187, %188 in 2 : vector<2x5x32xf32>, vector<2x5x32xf32>, vector<2x5x32xf32>, vector<2x5x32xf32> -> vector<2x5x128xf32>
    %c376 = arith.constant 376 : index
    %c0_68 = arith.constant 0 : index
    %190 = vector.load %arg2[%c376, %c0_68] : memref<520x128xf32, #tpu.memory_space<vmem>>, vector<128x4xf32>
    "tpu.trace_start"() <{level = 10 : i32, message = "blh,hf->blf"}> : () -> ()
    %cst_69 = arith.constant dense<0.000000e+00> : vector<2x5x4xf32>
    %191 = tpu.matmul %189, %190, %cst_69 {dimension_numbers = #tpu.dot_dimension_numbers<[2], [0], [0, 1], [1], [0, 0, 0, 1, 1, 1], [], []>} : vector<2x5x128xf32>, vector<128x4xf32>, vector<2x5x4xf32> -> vector<2x5x4xf32>
    "tpu.trace_stop"() : () -> ()
    %c12 = arith.constant 12 : index
    %c0_70 = arith.constant 0 : index
    %192 = vector.load %arg3[%c12, %c0_70] : memref<24x128xf32, #tpu.memory_space<vmem>>, vector<1x4xf32>
    %193 = vector.shape_cast %192 : vector<1x4xf32> to vector<1x1x4xf32>
    %194 = vector.broadcast %193 : vector<1x1x4xf32> to vector<2x5x4xf32>
    %195 = arith.addf %191, %194 : vector<2x5x4xf32>
    %cst_71 = arith.constant dense<0xFF800000> : vector<2x4xf32>
    %196 = vector.multi_reduction <maximumf>, %195, %cst_71 [1] : vector<2x5x4xf32> to vector<2x4xf32>
    %cst_72 = arith.constant 0.000000e+00 : f32
    %197 = vector.broadcast %cst_72 : f32 to vector<2x4xf32>
    %198 = arith.maximumf %196, %197 : vector<2x4xf32>
    %c512 = arith.constant 512 : index
    %c0_73 = arith.constant 0 : index
    %199 = vector.load %arg2[%c512, %c0_73] : memref<520x128xf32, #tpu.memory_space<vmem>>, vector<4x128xf32>
    %cst_74 = arith.constant dense<0.000000e+00> : vector<2x128xf32>
    %200 = tpu.matmul %198, %199, %cst_74 {dimension_numbers = #tpu.dot_dimension_numbers<[1], [0], [0], [1], [0, 0, 1, 1], [], []>} : vector<2x4xf32>, vector<4x128xf32>, vector<2x128xf32> -> vector<2x128xf32>
    %201 = arith.addf %184, %200 : vector<2x128xf32>
    %c0_75 = arith.constant 0 : index
    %c0_76 = arith.constant 0 : index
    %202 = vector.load %arg4[%c0_75, %c0_76] : memref<2x128xf32, #tpu.memory_space<vmem>>, vector<2x128xf32>
    tpu.vector_store %arg4[%c0_75, %c0_76], %201 {strides = array<i32>} : memref<2x128xf32, #tpu.memory_space<vmem>>, vector<2x128xf32>,
    return
  }
}

</mosaic_0001>

<llo_original>
// kernel: model_forward.1
$region0: #{model_forward.1}
  #allocation0 [shape = 'u32[]', space=smem, size = 0x4, offset = 0x4, fixed_abs, tag = 'smem constant byte address 0x4 - core index']
  #allocation1 [shape = 'u32[72,128]{1,0:T(1,128)}', space=vmem, size = 0x9000, scoped, tag = 'internal scratch']
  %s0 = inlined_call_operand.vmem [shape: s32[16,1], index: 0, kind: input, shape index: {}]
  %s1 = inlined_call_operand.vmem [shape: f32[2,8], index: 1, kind: input, shape index: {}]
  %s2 = inlined_call_operand.hbm [shape: f32[520,128], index: 2, kind: input, shape index: {}]
  %s3 = inlined_call_operand.hbm [shape: f32[24,128], index: 3, kind: input, shape index: {}]
  %s4 = inlined_call_operand.hbm [shape: f32[2,128], index: 4, kind: output, shape index: {}]
  %s5 = sld [smem:[#allocation0]]
  $region34: #{model_forward.1} parent=0
    _
  %s7 = ssub.s32 1, %s5
  %s8 = scalar_select 0, %s7, %s5
  $region1: #{model_forward.1} parent=0
    #allocation2 [shape = 'u8[266240]{0}', space=vmem, size = 0x41000, scoped, tag = 'input window, operand 2, single buffered']
    #allocation3 [shape = 's32[1]{0}', space=sflag, size = 0x4, scoped, tag = 'scoped memory for model_forward.1']
    #allocation4 [shape = 's32[1]{0}', space=sflag, size = 0x4, scoped, tag = 'scoped memory for model_forward.1']
    #allocation5 [shape = 'u8[12288]{0}', space=vmem, size = 0x3000, scoped, tag = 'input window, operand 3, single buffered']
    #allocation6 [shape = 's32[1]{0}', space=sflag, size = 0x4, scoped, tag = 'scoped memory for model_forward.1']
    #allocation7 [shape = 'u8[1024]{0}', space=vmem, size = 0x400, scoped, tag = 'output window, operand 0, single buffered']
    %9 = vsyncpa [#allocation3], 0
    %10 = vsyncpa [#allocation6], 0
    %11 = vsyncpa [#allocation4], 0
    // Predicated region
    $region2: #{model_forward.1} parent=1 // pred_check
      _
    $region3: #{model_forward.1} parent=1 // pred_check_branch
      %13 = sbr.rel (0) target = $region5
    $region4: #{model_forward.1} parent=1 // pred_region
      _
    $region5: #{model_forward.1} parent=1 // pred_fallthru
      _
    // Predicated region
    $region6: #{model_forward.1} parent=1 // pred_check
      _
    $region7: #{model_forward.1} parent=1 // pred_check_branch
      %15 = sbr.rel (0) target = $region9
    $region8: #{model_forward.1} parent=1 // pred_region
      _
    $region9: #{model_forward.1} parent=1 // pred_fallthru
      _
    // Predicated region
    $region10: #{model_forward.1} parent=1 // pred_check
      _
    $region11: #{model_forward.1} parent=1 // pred_check_branch
      %17 = sbr.rel (0) target = $region13
    $region12: #{model_forward.1} parent=1 // pred_region
      %19 = vsyncadd [#allocation3], 0
      %s20 = sshll.u32 %s2, 4
      %s21 = int_to_ptr.hbm [resolvable:$true] %s20
      %s22 = sshll.u32 [#allocation2], 4
      %s23 = int_to_ptr.vmem [resolvable:$true] %s22
      %28 = dma.hbm_to_vmem [thread:$0]  %s21, 8320, %s23, [#allocation3], 128, 128, 8
    $region13: #{model_forward.1} parent=1 // pred_fallthru
      _
    // Predicated region
    $region14: #{model_forward.1} parent=1 // pred_check
      _
    $region15: #{model_forward.1} parent=1 // pred_check_branch
      %30 = sbr.rel (0) target = $region17
    $region16: #{model_forward.1} parent=1 // pred_region
      %32 = vsyncadd [#allocation6], 0
      %s33 = sshll.u32 %s3, 4
      %s34 = int_to_ptr.hbm [resolvable:$true] %s33
      %s35 = sshll.u32 [#allocation5], 4
      %s36 = int_to_ptr.vmem [resolvable:$true] %s35
      %41 = dma.hbm_to_vmem [thread:$0]  %s34, 384, %s36, [#allocation6], 128, 128, 8
    $region17: #{model_forward.1} parent=1 // pred_fallthru
      _
    // Predicated region
    $region18: #{model_forward.1} parent=1 // pred_check
      _
    $region19: #{model_forward.1} parent=1 // pred_check_branch
      %43 = sbr.rel (0) target = $region21
    $region20: #{model_forward.1} parent=1 // pred_region
      %45 = dma.done [#allocation3], 8320
    $region21: #{model_forward.1} parent=1 // pred_fallthru
      _
    // Predicated region
    $region22: #{model_forward.1} parent=1 // pred_check
      _
    $region23: #{model_forward.1} parent=1 // pred_check_branch
      %47 = sbr.rel (0) target = $region25
    $region24: #{model_forward.1} parent=1 // pred_region
      %49 = dma.done [#allocation6], 384
    $region25: #{model_forward.1} parent=1 // pred_fallthru
      _
    %v50 = vld [vmem:[%s0] sm:$0xff]
    %v51 = vld [vmem:[%s0 + $0x8] sm:$0xff]
    %v52 = vlaneseq
    %v53 = vand.u32 %v52, 127
    %54 = vset.pattern.permute.xlu0 0
    %55 = vperm.xlu0 %54, %v50
    %v56 = vpop.permute.xlu0 %55
    %57 = vset.pattern.permute.xlu0 0
    %58 = vperm.xlu0 %57, %v51
    %v59 = vpop.permute.xlu0 %58
    %vm60 = vcmp.eq.s32.totalorder %v56, %v53
    %vm61 = vcmp.eq.s32.totalorder %v59, %v53
    %v62 = vsel %vm60, 1, 0
    %v63 = vsel %vm61, 1, 0
    %v64 = vcvt.s32.f32 %v62
    %v65 = vcvt.s32.f32 %v63
    %v66 = vld [vmem:[#allocation2] sm:$0xff]
    %v67 = vld [vmem:[#allocation2 + $0x8] sm:$0xff]
    %v68 = vld [vmem:[#allocation2 + $0x10] sm:$0xff]
    %v69 = vld [vmem:[#allocation2 + $0x18] sm:$0xff]
    %v70 = vld [vmem:[#allocation2 + $0x20] sm:$0xff]
    %v71 = vld [vmem:[#allocation2 + $0x28] sm:$0xff]
    %v72 = vld [vmem:[#allocation2 + $0x30] sm:$0x3]
    %v73 = vld [vmem:[#allocation5 + $0x10] sm:$0xff]
    %vm74 = vcmask 408576
    %v76 = vsel %vm74, %v64, 0
    %v79 = vsel %vm74, %v65, 0
    %vm81 = vcmask 1041408
    %v83 = vsel %vm81, %v72, 0
    %85 = vmatpush.msra.mxu0 0.0
    %86 = vmatpush.msra.mxu0 0.0
    %87 = vmatpush.msra.mxu0 0.0
    %88 = vmatpush.msra.mxu0 0.0
    %89 = vmatpush.msra.mxu0 0.0
    %90 = vmatpush.msra.mxu0 0.0
    %91 = vmatpush.msra.mxu0 0.0
    %92 = vmatpush.msra.mxu0 0.0
    %93 = vmatpush.msra.mxu0 0.0
    %94 = vmatpush.msra.mxu0 %v83
    %95 = vmatpush.msra.mxu0 %v71
    %96 = vmatpush.msra.mxu0 %v70
    %97 = vmatpush.msra.mxu0 %v69
    %98 = vmatpush.msra.mxu0 %v68
    %99 = vmatpush.msra.mxu0 %v67
    %100 = vmatpush.msra.mxu0 %v66
    %101 = vmatmul.f32.gmra.mxu0 %v76
    %v102 = vpop.f32.mrf.mxu0
    %v103 = vadd.f32 %v73, %v102
    %104 = vmatmul.f32.gmra.mxu0 %v79
    %v105 = vpop.f32.mrf.mxu0
    %v106 = vadd.f32 %v73, %v105
    %107 = vdwg.mxu0
    %v108 = vld [vmem:[#allocation5] sm:$0x1]
    %v109 = vld [vmem:[#allocation5 + $0x1] sm:$0x1]
    %vm110 = vcmask 261120
    %v111 = vsel %vm110, %v103, 0.0
    %112 = vadd.xlane.f32.xlu0 %v111
    %v113 = vpop.xlane.xlu0 %112
    %v114 = vsel %vm110, %v106, 0.0
    %115 = vadd.xlane.f32.xlu0 %v114
    %v116 = vpop.xlane.xlu0 %115
    %v117 = vrcp.pop 32.0
    %v118 = vmul.f32 32.0, %v117
    %v119 = vsub.f32 1.0, %v118
    %v120 = vmul.f32 %v117, %v119
    %v121 = vadd.f32 %v117, %v120
    %vm122 = vweird.f32 %v117
    %v123 = vsel %vm122, %v117, %v121
    %v124 = vmul.f32 %v113, %v123
    %v125 = vmul.f32 %v116, %v123
    %v126 = vsub.f32 %v103, %v124
    %v127 = vsub.f32 %v106, %v125
    %v128 = vmul.f32 %v126, %v126
    %v129 = vmul.f32 %v127, %v127
    %v130 = vsel %vm110, %v128, 0.0
    %131 = vadd.xlane.f32.xlu0 %v130
    %v132 = vpop.xlane.xlu0 %131
    %v133 = vsel %vm110, %v129, 0.0
    %134 = vadd.xlane.f32.xlu0 %v133
    %v135 = vpop.xlane.xlu0 %134
    %v136 = vmul.f32 %v132, %v123
    %v137 = vmul.f32 %v135, %v123
    %v138 = vadd.f32 %v136, 1e-12
    %v139 = vadd.f32 %v137, 1e-12
    %v140 = vrsqrt.pop %v138
    %v141 = vmul.f32 %v140, %v138
    %v142 = vmul.f32 %v141, %v140
    %v143 = vmul.f32 0.5, %v142
    %v144 = vsub.f32 1.5, %v143
    %v145 = vmul.f32 %v140, %v144
    %vm146 = vweird.f32 %v138
    %vm147 = vweird.f32 %v140
    %vm148 = vmor %vm146, %vm147
    %v149 = vsel %vm148, %v140, %v145
    %v150 = vrsqrt.pop %v139
    %v151 = vmul.f32 %v150, %v139
    %v152 = vmul.f32 %v151, %v150
    %v153 = vmul.f32 0.5, %v152
    %v154 = vsub.f32 1.5, %v153
    %v155 = vmul.f32 %v150, %v154
    %vm156 = vweird.f32 %v139
    %vm157 = vweird.f32 %v150
    %vm158 = vmor %vm156, %vm157
    %v159 = vsel %vm158, %v150, %v155
    %v160 = vmul.f32 %v126, %v149
    %v161 = vmul.f32 %v127, %v159
    %v162 = vperm.slane %v108, 0
    %v163 = vmul.f32 %v160, %v162
    %v164 = vmul.f32 %v161, %v162
    %v165 = vperm.slane %v109, 0
    %v166 = vadd.f32 %v163, %v165
    %v167 = vadd.f32 %v164, %v165
    %v168 = vld [vmem:[#allocation2 + $0x38] sm:$0xff]
    %v169 = vld [vmem:[#allocation2 + $0x40] sm:$0xff]
    %v170 = vld [vmem:[#allocation2 + $0x48] sm:$0xff]
    %v171 = vld [vmem:[#allocation2 + $0x50] sm:$0xff]
    %v172 = vld [vmem:[#allocation5 + $0x2] sm:$0x1]
    %v173 = vperm.slane %v172, 0
    %v175 = vsel %vm110, %v166, 0
    %v178 = vsel %vm110, %v167, 0
    %180 = vmatpush.msra.mxu0 0.0
    %181 = vmatpush.msra.mxu0 0.0
    %182 = vmatpush.msra.mxu0 0.0
    %183 = vmatpush.msra.mxu0 0.0
    %184 = vmatpush.msra.mxu0 0.0
    %185 = vmatpush.msra.mxu0 0.0
    %186 = vmatpush.msra.mxu0 0.0
    %187 = vmatpush.msra.mxu0 0.0
    %188 = vmatpush.msra.mxu0 0.0
    %189 = vmatpush.msra.mxu0 0.0
    %190 = vmatpush.msra.mxu0 0.0
    %191 = vmatpush.msra.mxu0 0.0
    %192 = vmatpush.msra.mxu0 %v171
    %193 = vmatpush.msra.mxu0 %v170
    %194 = vmatpush.msra.mxu0 %v169
    %195 = vmatpush.msra.mxu0 %v168
    %196 = vmatmul.f32.gmra.mxu0 %v175
    %v197 = vpop.f32.mrf.mxu0
    %v198 = vadd.f32 %v173, %v197
    %199 = vmatmul.f32.gmra.mxu0 %v178
    %v200 = vpop.f32.mrf.mxu0
    %v201 = vadd.f32 %v173, %v200
    %202 = vdwg.mxu0
    %204 = vrot.lane.b32.xlu0 %v198, 96
    %v205 = vpop.permute.xlu0 %204
    %v206 = vsel %vm110, %v198, 0
    %v208 = vsel %vm110, %v205, 0
    %210 = vmatpush.xpose.msra.mxu0 0.0
    %211 = vmatpush.xpose.msra.mxu0 0.0
    %212 = vmatpush.xpose.msra.mxu0 0.0
    %213 = vmatpush.xpose.msra.mxu0 0.0
    %214 = vmatpush.xpose.msra.mxu0 0.0
    %215 = vmatpush.xpose.msra.mxu0 0.0
    %216 = vmatpush.xpose.msra.mxu0 0.0
    %217 = vmatpush.xpose.msra.mxu0 0.0
    %218 = vmatpush.xpose.msra.mxu0 0.0
    %219 = vmatpush.xpose.msra.mxu0 0.0
    %220 = vmatpush.xpose.msra.mxu0 0.0
    %221 = vmatpush.xpose.msra.mxu0 0.0
    %222 = vmatpush.xpose.msra.mxu0 0.0
    %223 = vmatpush.xpose.msra.mxu0 0.0
    %224 = vmatpush.xpose.msra.mxu0 0.0
    %225 = vmatpush.xpose.msra.mxu0 %v208
    %226 = vmatmul.f32.gmra.mxu0 %v206
    %v227 = vpop.f32.mrf.mxu0
    %v228 = vadd.f32 0.0, %v227
    %229 = vdwg.mxu0
    %231 = vrot.lane.b32.xlu0 %v201, 96
    %v232 = vpop.permute.xlu0 %231
    %v233 = vsel %vm110, %v201, 0
    %v235 = vsel %vm110, %v232, 0
    %237 = vmatpush.xpose.msra.mxu0 0.0
    %238 = vmatpush.xpose.msra.mxu0 0.0
    %239 = vmatpush.xpose.msra.mxu0 0.0
    %240 = vmatpush.xpose.msra.mxu0 0.0
    %241 = vmatpush.xpose.msra.mxu0 0.0
    %242 = vmatpush.xpose.msra.mxu0 0.0
    %243 = vmatpush.xpose.msra.mxu0 0.0
    %244 = vmatpush.xpose.msra.mxu0 0.0
    %245 = vmatpush.xpose.msra.mxu0 0.0
    %246 = vmatpush.xpose.msra.mxu0 0.0
    %247 = vmatpush.xpose.msra.mxu0 0.0
    %248 = vmatpush.xpose.msra.mxu0 0.0
    %249 = vmatpush.xpose.msra.mxu0 0.0
    %250 = vmatpush.xpose.msra.mxu0 0.0
    %251 = vmatpush.xpose.msra.mxu0 0.0
    %252 = vmatpush.xpose.msra.mxu0 %v235
    %253 = vmatmul.f32.gmra.mxu0 %v233
    %v254 = vpop.f32.mrf.mxu0
    %v255 = vadd.f32 0.0, %v254
    %256 = vdwg.mxu0
    %v257 = vmul.f32 %v228, 0.17677669
    %v258 = vmul.f32 %v255, 0.17677669
    %v259 = vld [vmem:[%s1] sm:$0x3]
    %v260 = vsub.f32 1.0, %v259
    %v262 = vrot.slane %v260, 1
    %v264 = vmul.f32 %v260, -1e+09
    %v265 = vmul.f32 %v262, -1e+09
    %v268 = vperm.slane %v264, 0
    %v269 = vperm.slane %v265, 0
    %v272 = vadd.f32 %v257, %v268
    %v273 = vadd.f32 %v258, %v269
    %vm274 = vcmask 64512
    %v275 = vsel %vm274, %v272, -inf
    %276 = vmax.xlane.f32.xlu0 %v275
    %v277 = vpop.xlane.xlu0 %276
    %v278 = vsel %vm274, %v273, -inf
    %279 = vmax.xlane.f32.xlu0 %v278
    %v280 = vpop.xlane.xlu0 %279
    %v281 = vsub.f32 %v272, %v277
    %v282 = vsub.f32 %v273, %v280
    %v283 = vmul.f32 %v281, 1.442695
    %v284 = vpow.pop %v283
    %v285 = vmul.f32 %v282, 1.442695
    %v286 = vpow.pop %v285
    %v287 = vsel %vm274, %v284, 0.0
    %288 = vadd.xlane.f32.xlu0 %v287
    %v289 = vpop.xlane.xlu0 %288
    %v290 = vsel %vm274, %v286, 0.0
    %291 = vadd.xlane.f32.xlu0 %v290
    %v292 = vpop.xlane.xlu0 %291
    %v293 = vrcp.pop %v289
    %v294 = vrcp.pop %v292
    %v295 = vmul.f32 %v284, %v293
    %v296 = vmul.f32 %v286, %v294
    %297 = vrot.lane.b32.xlu0 %v198, 64
    %v298 = vpop.permute.xlu0 %297
    %v301 = vsel %vm274, %v295, 0
    %303 = vmatpush.msra.mxu0 0.0
    %304 = vmatpush.msra.mxu0 0.0
    %305 = vmatpush.msra.mxu0 0.0
    %306 = vmatpush.msra.mxu0 0.0
    %307 = vmatpush.msra.mxu0 0.0
    %308 = vmatpush.msra.mxu0 0.0
    %309 = vmatpush.msra.mxu0 0.0
    %310 = vmatpush.msra.mxu0 0.0
    %311 = vmatpush.msra.mxu0 0.0
    %312 = vmatpush.msra.mxu0 0.0
    %313 = vmatpush.msra.mxu0 0.0
    %314 = vmatpush.msra.mxu0 0.0
    %315 = vmatpush.msra.mxu0 0.0
    %316 = vmatpush.msra.mxu0 0.0
    %317 = vmatpush.msra.mxu0 0.0
    %318 = vmatpush.msra.mxu0 %v298
    %319 = vmatmul.f32.gmra.mxu0 %v301
    %v320 = vpop.f32.mrf.mxu0
    %v321 = vadd.f32 0.0, %v320
    %322 = vdwg.mxu0
    %323 = vrot.lane.b32.xlu0 %v201, 64
    %v324 = vpop.permute.xlu0 %323
    %v327 = vsel %vm274, %v296, 0
    %329 = vmatpush.msra.mxu0 0.0
    %330 = vmatpush.msra.mxu0 0.0
    %331 = vmatpush.msra.mxu0 0.0
    %332 = vmatpush.msra.mxu0 0.0
    %333 = vmatpush.msra.mxu0 0.0
    %334 = vmatpush.msra.mxu0 0.0
    %335 = vmatpush.msra.mxu0 0.0
    %336 = vmatpush.msra.mxu0 0.0
    %337 = vmatpush.msra.mxu0 0.0
    %338 = vmatpush.msra.mxu0 0.0
    %339 = vmatpush.msra.mxu0 0.0
    %340 = vmatpush.msra.mxu0 0.0
    %341 = vmatpush.msra.mxu0 0.0
    %342 = vmatpush.msra.mxu0 0.0
    %343 = vmatpush.msra.mxu0 0.0
    %344 = vmatpush.msra.mxu0 %v324
    %345 = vmatmul.f32.gmra.mxu0 %v327
    %v346 = vpop.f32.mrf.mxu0
    %v347 = vadd.f32 0.0, %v346
    %348 = vdwg.mxu0
    %v349 = vld [vmem:[#allocation2 + $0x58] sm:$0xff]
    %v350 = vld [vmem:[#allocation2 + $0x60] sm:$0xff]
    %v351 = vld [vmem:[#allocation2 + $0x68] sm:$0xff]
    %v352 = vld [vmem:[#allocation2 + $0x70] sm:$0xff]
    %v353 = vld [vmem:[#allocation5 + $0x3] sm:$0x1]
    %v354 = vperm.slane %v353, 0
    %v356 = vsel %vm110, %v321, 0
    %v359 = vsel %vm110, %v347, 0
    %361 = vmatpush.msra.mxu0 0.0
    %362 = vmatpush.msra.mxu0 0.0
    %363 = vmatpush.msra.mxu0 0.0
    %364 = vmatpush.msra.mxu0 0.0
    %365 = vmatpush.msra.mxu0 0.0
    %366 = vmatpush.msra.mxu0 0.0
    %367 = vmatpush.msra.mxu0 0.0
    %368 = vmatpush.msra.mxu0 0.0
    %369 = vmatpush.msra.mxu0 0.0
    %370 = vmatpush.msra.mxu0 0.0
    %371 = vmatpush.msra.mxu0 0.0
    %372 = vmatpush.msra.mxu0 0.0
    %373 = vmatpush.msra.mxu0 %v352
    %374 = vmatpush.msra.mxu0 %v351
    %375 = vmatpush.msra.mxu0 %v350
    %376 = vmatpush.msra.mxu0 %v349
    %377 = vmatmul.f32.gmra.mxu0 %v356
    %v378 = vpop.f32.mrf.mxu0
    %v379 = vadd.f32 %v354, %v378
    %380 = vmatmul.f32.gmra.mxu0 %v359
    %v381 = vpop.f32.mrf.mxu0
    %v382 = vadd.f32 %v354, %v381
    %383 = vdwg.mxu0
    %v384 = vadd.f32 %v166, %v379
    %v385 = vadd.f32 %v167, %v382
    %v386 = vld [vmem:[#allocation5 + $0x4] sm:$0x1]
    %v387 = vld [vmem:[#allocation5 + $0x5] sm:$0x1]
    %v388 = vsel %vm110, %v384, 0.0
    %389 = vadd.xlane.f32.xlu0 %v388
    %v390 = vpop.xlane.xlu0 %389
    %v391 = vsel %vm110, %v385, 0.0
    %392 = vadd.xlane.f32.xlu0 %v391
    %v393 = vpop.xlane.xlu0 %392
    %v394 = vmul.f32 %v390, %v123
    %v395 = vmul.f32 %v393, %v123
    %v396 = vsub.f32 %v384, %v394
    %v397 = vsub.f32 %v385, %v395
    %v398 = vmul.f32 %v396, %v396
    %v399 = vmul.f32 %v397, %v397
    %v400 = vsel %vm110, %v398, 0.0
    %401 = vadd.xlane.f32.xlu0 %v400
    %v402 = vpop.xlane.xlu0 %401
    %v403 = vsel %vm110, %v399, 0.0
    %404 = vadd.xlane.f32.xlu0 %v403
    %v405 = vpop.xlane.xlu0 %404
    %v406 = vmul.f32 %v402, %v123
    %v407 = vmul.f32 %v405, %v123
    %v408 = vadd.f32 %v406, 1e-12
    %v409 = vadd.f32 %v407, 1e-12
    %v410 = vrsqrt.pop %v408
    %v411 = vmul.f32 %v410, %v408
    %v412 = vmul.f32 %v411, %v410
    %v413 = vmul.f32 0.5, %v412
    %v414 = vsub.f32 1.5, %v413
    %v415 = vmul.f32 %v410, %v414
    %vm416 = vweird.f32 %v408
    %vm417 = vweird.f32 %v410
    %vm418 = vmor %vm416, %vm417
    %v419 = vsel %vm418, %v410, %v415
    %v420 = vrsqrt.pop %v409
    %v421 = vmul.f32 %v420, %v409
    %v422 = vmul.f32 %v421, %v420
    %v423 = vmul.f32 0.5, %v422
    %v424 = vsub.f32 1.5, %v423
    %v425 = vmul.f32 %v420, %v424
    %vm426 = vweird.f32 %v409
    %vm427 = vweird.f32 %v420
    %vm428 = vmor %vm426, %vm427
    %v429 = vsel %vm428, %v420, %v425
    %v430 = vmul.f32 %v396, %v419
    %v431 = vmul.f32 %v397, %v429
    %v432 = vperm.slane %v386, 0
    %v433 = vmul.f32 %v430, %v432
    %v434 = vmul.f32 %v431, %v432
    %v435 = vperm.slane %v387, 0
    %v436 = vadd.f32 %v433, %v435
    %v437 = vadd.f32 %v434, %v435
    %v438 = vld [vmem:[#allocation2 + $0x78] sm:$0xff]
    %v439 = vld [vmem:[#allocation2 + $0x80] sm:$0xff]
    %v440 = vld [vmem:[#allocation2 + $0x88] sm:$0xff]
    %v441 = vld [vmem:[#allocation2 + $0x90] sm:$0xff]
    %v442 = vld [vmem:[#allocation5 + $0x6] sm:$0x1]
    %v443 = vperm.slane %v442, 0
    %v445 = vsel %vm110, %v436, 0
    %v448 = vsel %vm110, %v437, 0
    %450 = vmatpush.msra.mxu0 0.0
    %451 = vmatpush.msra.mxu0 0.0
    %452 = vmatpush.msra.mxu0 0.0
    %453 = vmatpush.msra.mxu0 0.0
    %454 = vmatpush.msra.mxu0 0.0
    %455 = vmatpush.msra.mxu0 0.0
    %456 = vmatpush.msra.mxu0 0.0
    %457 = vmatpush.msra.mxu0 0.0
    %458 = vmatpush.msra.mxu0 0.0
    %459 = vmatpush.msra.mxu0 0.0
    %460 = vmatpush.msra.mxu0 0.0
    %461 = vmatpush.msra.mxu0 0.0
    %462 = vmatpush.msra.mxu0 %v441
    %463 = vmatpush.msra.mxu0 %v440
    %464 = vmatpush.msra.mxu0 %v439
    %465 = vmatpush.msra.mxu0 %v438
    %466 = vmatmul.f32.gmra.mxu0 %v445
    %v467 = vpop.f32.mrf.mxu0
    %v468 = vadd.f32 %v443, %v467
    %469 = vmatmul.f32.gmra.mxu0 %v448
    %v470 = vpop.f32.mrf.mxu0
    %v471 = vadd.f32 %v443, %v470
    %472 = vdwg.mxu0
    %v473 = vmul.f32 %v468, 0.5
    %v474 = vmul.f32 %v471, 0.5
    %v475 = vmul.f32 %v468, 0.044715
    %v476 = vmul.f32 %v471, 0.044715
    %v477 = vmul.f32 %v475, %v468
    %v478 = vmul.f32 %v476, %v471
    %v479 = vmul.f32 %v477, %v468
    %v480 = vmul.f32 %v478, %v471
    %v481 = vadd.f32 %v468, %v479
    %v482 = vadd.f32 %v471, %v480
    %v483 = vmul.f32 %v481, 0.7978846
    %v484 = vmul.f32 %v482, 0.7978846
    %v485 = vtanh.pop %v483
    %v486 = vtanh.pop %v484
    %v487 = vadd.f32 %v485, 1.0
    %v488 = vadd.f32 %v486, 1.0
    %v489 = vmul.f32 %v473, %v487
    %v490 = vmul.f32 %v474, %v488
    %v491 = vld [vmem:[#allocation2 + $0x98] sm:$0xff]
    %v492 = vld [vmem:[#allocation2 + $0xa0] sm:$0xff]
    %v493 = vld [vmem:[#allocation2 + $0xa8] sm:$0xff]
    %v494 = vld [vmem:[#allocation2 + $0xb0] sm:$0xff]
    %v495 = vld [vmem:[#allocation2 + $0xb8] sm:$0xff]
    %v496 = vld [vmem:[#allocation2 + $0xc0] sm:$0xff]
    %v497 = vld [vmem:[#allocation2 + $0xc8] sm:$0xff]
    %v498 = vld [vmem:[#allocation2 + $0xd0] sm:$0xff]
    %v499 = vld [vmem:[#allocation5 + $0x7] sm:$0x1]
    %v500 = vperm.slane %v499, 0
    %vm501 = vcmask 523264
    %v503 = vsel %vm501, %v489, 0
    %v506 = vsel %vm501, %v490, 0
    %508 = vmatpush.msra.mxu0 0.0
    %509 = vmatpush.msra.mxu0 0.0
    %510 = vmatpush.msra.mxu0 0.0
    %511 = vmatpush.msra.mxu0 0.0
    %512 = vmatpush.msra.mxu0 0.0
    %513 = vmatpush.msra.mxu0 0.0
    %514 = vmatpush.msra.mxu0 0.0
    %515 = vmatpush.msra.mxu0 0.0
    %516 = vmatpush.msra.mxu0 %v498
    %517 = vmatpush.msra.mxu0 %v497
    %518 = vmatpush.msra.mxu0 %v496
    %519 = vmatpush.msra.mxu0 %v495
    %520 = vmatpush.msra.mxu0 %v494
    %521 = vmatpush.msra.mxu0 %v493
    %522 = vmatpush.msra.mxu0 %v492
    %523 = vmatpush.msra.mxu0 %v491
    %524 = vmatmul.f32.gmra.mxu0 %v503
    %v525 = vpop.f32.mrf.mxu0
    %v526 = vadd.f32 %v500, %v525
    %527 = vmatmul.f32.gmra.mxu0 %v506
    %v528 = vpop.f32.mrf.mxu0
    %v529 = vadd.f32 %v500, %v528
    %530 = vdwg.mxu0
    %v531 = vadd.f32 %v436, %v526
    %v532 = vadd.f32 %v437, %v529
    %v533 = vld [vmem:[#allocation5 + $0x8] sm:$0x1]
    %v534 = vld [vmem:[#allocation5 + $0x9] sm:$0x1]
    %v535 = vsel %vm110, %v531, 0.0
    %536 = vadd.xlane.f32.xlu0 %v535
    %v537 = vpop.xlane.xlu0 %536
    %v538 = vsel %vm110, %v532, 0.0
    %539 = vadd.xlane.f32.xlu0 %v538
    %v540 = vpop.xlane.xlu0 %539
    %v541 = vmul.f32 %v537, %v123
    %v542 = vmul.f32 %v540, %v123
    %v543 = vsub.f32 %v531, %v541
    %v544 = vsub.f32 %v532, %v542
    %v545 = vmul.f32 %v543, %v543
    %v546 = vmul.f32 %v544, %v544
    %v547 = vsel %vm110, %v545, 0.0
    %548 = vadd.xlane.f32.xlu0 %v547
    %v549 = vpop.xlane.xlu0 %548
    %v550 = vsel %vm110, %v546, 0.0
    %551 = vadd.xlane.f32.xlu0 %v550
    %v552 = vpop.xlane.xlu0 %551
    %v553 = vmul.f32 %v549, %v123
    %v554 = vmul.f32 %v552, %v123
    %v555 = vadd.f32 %v553, 1e-12
    %v556 = vadd.f32 %v554, 1e-12
    %v557 = vrsqrt.pop %v555
    %v558 = vmul.f32 %v557, %v555
    %v559 = vmul.f32 %v558, %v557
    %v560 = vmul.f32 0.5, %v559
    %v561 = vsub.f32 1.5, %v560
    %v562 = vmul.f32 %v557, %v561
    %vm563 = vweird.f32 %v555
    %vm564 = vweird.f32 %v557
    %vm565 = vmor %vm563, %vm564
    %v566 = vsel %vm565, %v557, %v562
    %v567 = vrsqrt.pop %v556
    %v568 = vmul.f32 %v567, %v556
    %v569 = vmul.f32 %v568, %v567
    %v570 = vmul.f32 0.5, %v569
    %v571 = vsub.f32 1.5, %v570
    %v572 = vmul.f32 %v567, %v571
    %vm573 = vweird.f32 %v556
    %vm574 = vweird.f32 %v567
    %vm575 = vmor %vm573, %vm574
    %v576 = vsel %vm575, %v567, %v572
    %v577 = vmul.f32 %v543, %v566
    %v578 = vmul.f32 %v544, %v576
    %v579 = vperm.slane %v533, 0
    %v580 = vmul.f32 %v577, %v579
    %v581 = vmul.f32 %v578, %v579
    %v582 = vperm.slane %v534, 0
    %v583 = vadd.f32 %v580, %v582
    %v584 = vadd.f32 %v581, %v582
    %v585 = vld [vmem:[#allocation5 + $0xd] sm:$0x1]
    %v586 = vperm.slane %v585, 0
    %v587 = vadd.f32 %v586, 0.0
    %v590 = vrot.slane %v583, 1
    %v591 = vrot.slane %v584, 1
    %592 = vrot.lane.b32.xlu0 %v590, 32
    %v593 = vpop.permute.xlu0 %592
    %594 = vrot.lane.b32.xlu0 %v591, 32
    %v595 = vpop.permute.xlu0 %594
    %v598 = vsel %vm110, %v583, %v593
    %v599 = vsel %vm110, %v584, %v595
    %v600 = vld [vmem:[#allocation2 + $0xd8] sm:$0xff]
    %v601 = vld [vmem:[#allocation2 + $0xe0] sm:$0xff]
    %v602 = vld [vmem:[#allocation2 + $0xe8] sm:$0xff]
    %v603 = vld [vmem:[#allocation2 + $0xf0] sm:$0xff]
    %v604 = vld [vmem:[#allocation2 + $0xf8] sm:$0xff]
    %v605 = vld [vmem:[#allocation2 + $0x100] sm:$0xff]
    %v606 = vld [vmem:[#allocation2 + $0x108] sm:$0xff]
    %v607 = vld [vmem:[#allocation2 + $0x110] sm:$0xff]
    %v608 = vld [vmem:[#allocation5 + $0xa] sm:$0x1]
    %v609 = vperm.slane %v608, 0
    %v612 = vrot.slane %v598, 1
    %v613 = vrot.slane %v598, 2
    %v614 = vrot.slane %v598, 3
    %v615 = vrot.slane %v598, 4
    %v616 = vrot.slane %v598, 5
    %v617 = vrot.slane %v598, 6
    %v618 = vrot.slane %v599, 1
    %v619 = vrot.slane %v599, 2
    %v620 = vrot.slane %v599, 3
    %v621 = vrot.slane %v599, 4
    %v622 = vrot.slane %v599, 5
    %v623 = vrot.slane %v599, 6
    %v625 = vrot.slane %v609, 1
    %v626 = vrot.slane %v609, 2
    %v627 = vrot.slane %v609, 3
    %v628 = vrot.slane %v609, 4
    %v629 = vrot.slane %v609, 5
    %v630 = vrot.slane %v609, 6
    %631 = vst [vmem:[#allocation1] ss:$9 sm:$0xff] %v598
    %s632 = scalar_lea.vmem [#allocation1], 1
    %633 = vst [vmem:[%s632] ss:$9 sm:$0xff] %v612
    %s634 = scalar_lea.vmem [#allocation1], 2
    %635 = vst [vmem:[%s634] ss:$9 sm:$0xff] %v613
    %s636 = scalar_lea.vmem [#allocation1], 3
    %637 = vst [vmem:[%s636] ss:$9 sm:$0xff] %v614
    %s638 = scalar_lea.vmem [#allocation1], 4
    %639 = vst [vmem:[%s638] ss:$9 sm:$0xff] %v615
    %s640 = scalar_lea.vmem [#allocation1], 5
    %641 = vst [vmem:[%s640] ss:$9 sm:$0xff] %v616
    %s642 = scalar_lea.vmem [#allocation1], 6
    %643 = vst [vmem:[%s642] ss:$9 sm:$0xff] %v617
    %s644 = scalar_lea.vmem [#allocation1], 7
    %645 = vst [vmem:[%s644] ss:$9 sm:$0xff] %v599
    %v646 = vld [vmem:[#allocation1] sm:$0xff]
    %647 = vst [vmem:[#allocation1] ss:$9 sm:$0xff] %v618
    %648 = vst [vmem:[%s632] ss:$9 sm:$0xff] %v619
    %649 = vst [vmem:[%s634] ss:$9 sm:$0xff] %v620
    %650 = vst [vmem:[%s636] ss:$9 sm:$0xff] %v621
    %651 = vst [vmem:[%s638] ss:$9 sm:$0xff] %v622
    %652 = vst [vmem:[%s640] ss:$9 sm:$0xff] %v623
    %v653 = vld [vmem:[#allocation1] sm:$0xff]
    %654 = vst [vmem:[#allocation1] ss:$9 sm:$0xff] %v609
    %s655 = scalar_lea.vmem [#allocation1], 1
    %656 = vst [vmem:[%s655] ss:$9 sm:$0xff] %v625
    %s657 = scalar_lea.vmem [#allocation1], 2
    %658 = vst [vmem:[%s657] ss:$9 sm:$0xff] %v626
    %s659 = scalar_lea.vmem [#allocation1], 3
    %660 = vst [vmem:[%s659] ss:$9 sm:$0xff] %v627
    %s661 = scalar_lea.vmem [#allocation1], 4
    %662 = vst [vmem:[%s661] ss:$9 sm:$0xff] %v628
    %s663 = scalar_lea.vmem [#allocation1], 5
    %664 = vst [vmem:[%s663] ss:$9 sm:$0xff] %v629
    %s665 = scalar_lea.vmem [#allocation1], 6
    %666 = vst [vmem:[%s665] ss:$9 sm:$0xff] %v630
    %s667 = scalar_lea.vmem [#allocation1], 7
    %668 = vst [vmem:[%s667] ss:$9 sm:$0xff] %v609
    %v669 = vld [vmem:[#allocation1] sm:$0xff]
    %670 = vst [vmem:[#allocation1] ss:$9 sm:$0xff] %v625
    %671 = vst [vmem:[%s655] ss:$9 sm:$0xff] %v626
    %672 = vst [vmem:[%s657] ss:$9 sm:$0xff] %v627
    %673 = vst [vmem:[%s659] ss:$9 sm:$0xff] %v628
    %674 = vst [vmem:[%s661] ss:$9 sm:$0xff] %v629
    %675 = vst [vmem:[%s663] ss:$9 sm:$0xff] %v630
    %v676 = vld [vmem:[#allocation1] sm:$0xff]
    %v679 = vsel %vm501, %v646, 0
    %v681 = vsel %vm501, %v653, 0
    %683 = vmatpush.msra.mxu0 0.0
    %684 = vmatpush.msra.mxu0 0.0
    %685 = vmatpush.msra.mxu0 0.0
    %686 = vmatpush.msra.mxu0 0.0
    %687 = vmatpush.msra.mxu0 0.0
    %688 = vmatpush.msra.mxu0 0.0
    %689 = vmatpush.msra.mxu0 0.0
    %690 = vmatpush.msra.mxu0 0.0
    %691 = vmatpush.msra.mxu0 %v607
    %692 = vmatpush.msra.mxu0 %v606
    %693 = vmatpush.msra.mxu0 %v605
    %694 = vmatpush.msra.mxu0 %v604
    %695 = vmatpush.msra.mxu0 %v603
    %696 = vmatpush.msra.mxu0 %v602
    %697 = vmatpush.msra.mxu0 %v601
    %698 = vmatpush.msra.mxu0 %v600
    %699 = vmatmul.f32.gmra.mxu0 %v679
    %v700 = vpop.f32.mrf.mxu0
    %v701 = vadd.f32 %v669, %v700
    %702 = vmatmul.f32.gmra.mxu0 %v681
    %v703 = vpop.f32.mrf.mxu0
    %v704 = vadd.f32 %v676, %v703
    %705 = vdwg.mxu0
    %v708 = vrot.slane %v701, 1
    %v709 = vrot.slane %v701, 2
    %v710 = vrot.slane %v701, 3
    %v711 = vrot.slane %v701, 4
    %v712 = vrot.slane %v701, 5
    %v713 = vrot.slane %v701, 6
    %v714 = vrot.slane %v701, 7
    %v715 = vrot.slane %v704, 1
    %v716 = vrot.slane %v704, 2
    %v717 = vrot.slane %v704, 3
    %v718 = vrot.slane %v704, 4
    %v719 = vrot.slane %v704, 5
    %720 = vst [vmem:[#allocation1] ss:$9 sm:$0xff] %v701
    %s721 = scalar_lea.vmem [#allocation1], 1
    %722 = vst [vmem:[%s721] ss:$9 sm:$0xff] %v708
    %s723 = scalar_lea.vmem [#allocation1], 2
    %724 = vst [vmem:[%s723] ss:$9 sm:$0xff] %v709
    %s725 = scalar_lea.vmem [#allocation1], 3
    %726 = vst [vmem:[%s725] ss:$9 sm:$0xff] %v710
    %s727 = scalar_lea.vmem [#allocation1], 4
    %728 = vst [vmem:[%s727] ss:$9 sm:$0xff] %v711
    %s729 = scalar_lea.vmem [#allocation1], 5
    %730 = vst [vmem:[%s729] ss:$9 sm:$0xff] %v712
    %s731 = scalar_lea.vmem [#allocation1], 6
    %732 = vst [vmem:[%s731] ss:$9 sm:$0xff] %v713
    %v733 = vld [vmem:[#allocation1] sm:$0xff]
    %734 = vst [vmem:[#allocation1] ss:$9 sm:$0xff] %v714
    %735 = vst [vmem:[%s721] ss:$9 sm:$0xff] %v704
    %736 = vst [vmem:[%s723] ss:$9 sm:$0xff] %v715
    %737 = vst [vmem:[%s725] ss:$9 sm:$0xff] %v716
    %738 = vst [vmem:[%s727] ss:$9 sm:$0xff] %v717
    %739 = vst [vmem:[%s729] ss:$9 sm:$0xff] %v718
    %740 = vst [vmem:[%s731] ss:$9 sm:$0xff] %v719
    %v741 = vld [vmem:[#allocation1] sm:$0xff]
    %vm744 = vcmask 30720
    %v745 = vsel %vm744, %v733, -inf
    %v746 = vrot.slane %v745, 4
    %v747 = vmax.f32 %v745, %v746
    %v748 = vrot.slane %v747, 2
    %v749 = vmax.f32 %v747, %v748
    %v750 = vrot.slane %v749, 1
    %v751 = vmax.f32 %v749, %v750
    %v752 = vsel %vm744, %v741, -inf
    %v753 = vrot.slane %v752, 4
    %v754 = vmax.f32 %v752, %v753
    %v755 = vrot.slane %v754, 2
    %v756 = vmax.f32 %v754, %v755
    %v757 = vrot.slane %v756, 1
    %v758 = vmax.f32 %v756, %v757
    %v759 = vmax.f32 %v751, 0.0
    %v760 = vmax.f32 %v758, 0.0
    %v761 = vld [vmem:[#allocation2 + $0x1f8] sm:$0xf]
    %vm764 = vcmask 1041409
    %v765 = vsel %vm764, %v760, %v759
    %vm766 = vcmask 31744
    %v767 = vsel %vm766, %v765, 0
    %vm769 = vcmask 1043456
    %v771 = vsel %vm769, %v761, 0
    %773 = vmatpush.msra.mxu0 0.0
    %774 = vmatpush.msra.mxu0 0.0
    %775 = vmatpush.msra.mxu0 0.0
    %776 = vmatpush.msra.mxu0 0.0
    %777 = vmatpush.msra.mxu0 0.0
    %778 = vmatpush.msra.mxu0 0.0
    %779 = vmatpush.msra.mxu0 0.0
    %780 = vmatpush.msra.mxu0 0.0
    %781 = vmatpush.msra.mxu0 0.0
    %782 = vmatpush.msra.mxu0 0.0
    %783 = vmatpush.msra.mxu0 0.0
    %784 = vmatpush.msra.mxu0 0.0
    %785 = vmatpush.msra.mxu0 0.0
    %786 = vmatpush.msra.mxu0 0.0
    %787 = vmatpush.msra.mxu0 0.0
    %788 = vmatpush.msra.mxu0 %v771
    %789 = vmatmul.f32.gmra.mxu0 %v767
    %v790 = vpop.f32.mrf.mxu0
    %v791 = vadd.f32 0.0, %v790
    %792 = vdwg.mxu0
    %v793 = vadd.f32 %v587, %v791
    %v794 = vrot.slane %v583, 2
    %v795 = vrot.slane %v584, 2
    %796 = vrot.lane.b32.xlu0 %v794, 64
    %v797 = vpop.permute.xlu0 %796
    %798 = vrot.lane.b32.xlu0 %v795, 64
    %v799 = vpop.permute.xlu0 %798
    %v802 = vsel %vm501, %v598, %v797
    %v803 = vsel %vm501, %v599, %v799
    %v804 = vld [vmem:[#allocation2 + $0x118] sm:$0xff]
    %v805 = vld [vmem:[#allocation2 + $0x120] sm:$0xff]
    %v806 = vld [vmem:[#allocation2 + $0x128] sm:$0xff]
    %v807 = vld [vmem:[#allocation2 + $0x130] sm:$0xff]
    %v808 = vld [vmem:[#allocation2 + $0x138] sm:$0xff]
    %v809 = vld [vmem:[#allocation2 + $0x140] sm:$0xff]
    %v810 = vld [vmem:[#allocation2 + $0x148] sm:$0xff]
    %v811 = vld [vmem:[#allocation2 + $0x150] sm:$0xff]
    %v812 = vld [vmem:[#allocation2 + $0x158] sm:$0xff]
    %v813 = vld [vmem:[#allocation2 + $0x160] sm:$0xff]
    %v814 = vld [vmem:[#allocation2 + $0x168] sm:$0xff]
    %v815 = vld [vmem:[#allocation2 + $0x170] sm:$0xff]
    %v816 = vld [vmem:[#allocation5 + $0xb] sm:$0x1]
    %v817 = vperm.slane %v816, 0
    %v820 = vrot.slane %v802, 2
    %v821 = vrot.slane %v802, 4
    %v822 = vrot.slane %v803, 2
    %v823 = vrot.slane %v803, 4
    %v825 = vrot.slane %v817, 2
    %v826 = vrot.slane %v817, 4
    %827 = vst [vmem:[#allocation1] ss:$4 sm:$0xff] %v802
    %s828 = scalar_lea.vmem [#allocation1], 1
    %829 = vst [vmem:[%s828] ss:$4 sm:$0xff] %v820
    %s830 = scalar_lea.vmem [#allocation1], 2
    %831 = vst [vmem:[%s830] ss:$4 sm:$0xff] %v821
    %s832 = scalar_lea.vmem [#allocation1], 3
    %833 = vst [vmem:[%s832] ss:$4 sm:$0xff] %v803
    %s834 = scalar_lea.vmem [#allocation1], 32
    %835 = vst [vmem:[%s834] ss:$4 sm:$0xff] %v822
    %s836 = scalar_lea.vmem [#allocation1], 33
    %837 = vst [vmem:[%s836] ss:$4 sm:$0xff] %v823
    %v838 = vld.sshfl [vmem:[#allocation1] sm:$0xff pattern:$0x73625140]
    %v839 = vld.sshfl [vmem:[#allocation1 + $0x20] sm:$0xff pattern:$0x73625140]
    %840 = vst [vmem:[#allocation1] ss:$4 sm:$0xff] %v817
    %s841 = scalar_lea.vmem [#allocation1], 1
    %842 = vst [vmem:[%s841] ss:$4 sm:$0xff] %v825
    %s843 = scalar_lea.vmem [#allocation1], 2
    %844 = vst [vmem:[%s843] ss:$4 sm:$0xff] %v826
    %s845 = scalar_lea.vmem [#allocation1], 3
    %846 = vst [vmem:[%s845] ss:$4 sm:$0xff] %v817
    %s847 = scalar_lea.vmem [#allocation1], 32
    %848 = vst [vmem:[%s847] ss:$4 sm:$0xff] %v825
    %s849 = scalar_lea.vmem [#allocation1], 33
    %850 = vst [vmem:[%s849] ss:$4 sm:$0xff] %v826
    %v851 = vld.sshfl [vmem:[#allocation1] sm:$0xff pattern:$0x73625140]
    %v852 = vld.sshfl [vmem:[#allocation1 + $0x20] sm:$0xff pattern:$0x73625140]
    %vm855 = vcmask 785408
    %v856 = vsel %vm855, %v838, 0
    %v858 = vsel %vm855, %v839, 0
    %860 = vmatpush.msra.mxu0 0.0
    %861 = vmatpush.msra.mxu0 0.0
    %862 = vmatpush.msra.mxu0 0.0
    %863 = vmatpush.msra.mxu0 0.0
    %864 = vmatpush.msra.mxu0 %v815
    %865 = vmatpush.msra.mxu0 %v814
    %866 = vmatpush.msra.mxu0 %v813
    %867 = vmatpush.msra.mxu0 %v812
    %868 = vmatpush.msra.mxu0 %v811
    %869 = vmatpush.msra.mxu0 %v810
    %870 = vmatpush.msra.mxu0 %v809
    %871 = vmatpush.msra.mxu0 %v808
    %872 = vmatpush.msra.mxu0 %v807
    %873 = vmatpush.msra.mxu0 %v806
    %874 = vmatpush.msra.mxu0 %v805
    %875 = vmatpush.msra.mxu0 %v804
    %876 = vmatmul.f32.gmra.mxu0 %v856
    %v877 = vpop.f32.mrf.mxu0
    %v878 = vadd.f32 %v851, %v877
    %879 = vmatmul.f32.gmra.mxu0 %v858
    %v880 = vpop.f32.mrf.mxu0
    %v881 = vadd.f32 %v852, %v880
    %882 = vdwg.mxu0
    %v885 = vrot.slane %v878, 2
    %v886 = vrot.slane %v878, 4
    %v887 = vrot.slane %v878, 6
    %v888 = vrot.slane %v881, 2
    %889 = vst [vmem:[#allocation1] ss:$4 sm:$0xff] %v878
    %s890 = scalar_lea.vmem [#allocation1], 1
    %891 = vst [vmem:[%s890] ss:$4 sm:$0xff] %v885
    %s892 = scalar_lea.vmem [#allocation1], 2
    %893 = vst [vmem:[%s892] ss:$4 sm:$0xff] %v886
    %v894 = vld.sshfl [vmem:[#allocation1] sm:$0xff pattern:$0x73625140]
    %s895 = scalar_lea.vmem [#allocation1], 32
    %896 = vst [vmem:[%s895] ss:$4 sm:$0xff] %v887
    %s897 = scalar_lea.vmem [#allocation1], 33
    %898 = vst [vmem:[%s897] ss:$4 sm:$0xff] %v881
    %s899 = scalar_lea.vmem [#allocation1], 34
    %900 = vst [vmem:[%s899] ss:$4 sm:$0xff] %v888
    %v901 = vld.sshfl [vmem:[#allocation1 + $0x20] sm:$0xff pattern:$0x73625140]
    %vm904 = vcmask 29696
    %v905 = vsel %vm904, %v894, -inf
    %v906 = vrot.slane %v905, 4
    %v907 = vmax.f32 %v905, %v906
    %v908 = vrot.slane %v907, 2
    %v909 = vmax.f32 %v907, %v908
    %v910 = vrot.slane %v909, 1
    %v911 = vmax.f32 %v909, %v910
    %v912 = vsel %vm904, %v901, -inf
    %v913 = vrot.slane %v912, 4
    %v914 = vmax.f32 %v912, %v913
    %v915 = vrot.slane %v914, 2
    %v916 = vmax.f32 %v914, %v915
    %v917 = vrot.slane %v916, 1
    %v918 = vmax.f32 %v916, %v917
    %v919 = vmax.f32 %v911, 0.0
    %v920 = vmax.f32 %v918, 0.0
    %v921 = vld [vmem:[#allocation2 + $0x1fc] sm:$0xf]
    %v924 = vsel %vm764, %v920, %v919
    %v925 = vsel %vm766, %v924, 0
    %v928 = vsel %vm769, %v921, 0
    %930 = vmatpush.msra.mxu0 0.0
    %931 = vmatpush.msra.mxu0 0.0
    %932 = vmatpush.msra.mxu0 0.0
    %933 = vmatpush.msra.mxu0 0.0
    %934 = vmatpush.msra.mxu0 0.0
    %935 = vmatpush.msra.mxu0 0.0
    %936 = vmatpush.msra.mxu0 0.0
    %937 = vmatpush.msra.mxu0 0.0
    %938 = vmatpush.msra.mxu0 0.0
    %939 = vmatpush.msra.mxu0 0.0
    %940 = vmatpush.msra.mxu0 0.0
    %941 = vmatpush.msra.mxu0 0.0
    %942 = vmatpush.msra.mxu0 0.0
    %943 = vmatpush.msra.mxu0 0.0
    %944 = vmatpush.msra.mxu0 0.0
    %945 = vmatpush.msra.mxu0 %v928
    %946 = vmatmul.f32.gmra.mxu0 %v925
    %v947 = vpop.f32.mrf.mxu0
    %v948 = vadd.f32 0.0, %v947
    %949 = vdwg.mxu0
    %v950 = vadd.f32 %v793, %v948
    %v951 = vrot.slane %v583, 3
    %v952 = vrot.slane %v584, 3
    %953 = vrot.lane.b32.xlu0 %v951, 96
    %v954 = vpop.permute.xlu0 %953
    %955 = vrot.lane.b32.xlu0 %v952, 96
    %v956 = vpop.permute.xlu0 %955
    %v959 = vsel %vm855, %v802, %v954
    %v960 = vsel %vm855, %v803, %v956
    %v961 = vld [vmem:[#allocation2 + $0x178] sm:$0xff]
    %v962 = vld [vmem:[#allocation2 + $0x180] sm:$0xff]
    %v963 = vld [vmem:[#allocation2 + $0x188] sm:$0xff]
    %v964 = vld [vmem:[#allocation2 + $0x190] sm:$0xff]
    %v965 = vld [vmem:[#allocation2 + $0x198] sm:$0xff]
    %v966 = vld [vmem:[#allocation2 + $0x1a0] sm:$0xff]
    %v967 = vld [vmem:[#allocation2 + $0x1a8] sm:$0xff]
    %v968 = vld [vmem:[#allocation2 + $0x1b0] sm:$0xff]
    %v969 = vld [vmem:[#allocation2 + $0x1b8] sm:$0xff]
    %v970 = vld [vmem:[#allocation2 + $0x1c0] sm:$0xff]
    %v971 = vld [vmem:[#allocation2 + $0x1c8] sm:$0xff]
    %v972 = vld [vmem:[#allocation2 + $0x1d0] sm:$0xff]
    %v973 = vld [vmem:[#allocation2 + $0x1d8] sm:$0xff]
    %v974 = vld [vmem:[#allocation2 + $0x1e0] sm:$0xff]
    %v975 = vld [vmem:[#allocation2 + $0x1e8] sm:$0xff]
    %v976 = vld [vmem:[#allocation2 + $0x1f0] sm:$0xff]
    %v977 = vld [vmem:[#allocation5 + $0xc] sm:$0x1]
    %v978 = vperm.slane %v977, 0
    %v981 = vrot.slane %v959, 1
    %v982 = vrot.slane %v959, 2
    %v983 = vrot.slane %v959, 3
    %v984 = vrot.slane %v959, 4
    %v985 = vrot.slane %v960, 1
    %v986 = vrot.slane %v960, 2
    %v987 = vrot.slane %v960, 3
    %v988 = vrot.slane %v960, 4
    %v990 = vrot.slane %v978, 1
    %v991 = vrot.slane %v978, 2
    %v992 = vrot.slane %v978, 3
    %v993 = vrot.slane %v978, 4
    %994 = vst [vmem:[#allocation1] ss:$9 sm:$0xff] %v959
    %s995 = scalar_lea.vmem [#allocation1], 1
    %996 = vst [vmem:[%s995] ss:$9 sm:$0xff] %v981
    %s997 = scalar_lea.vmem [#allocation1], 2
    %998 = vst [vmem:[%s997] ss:$9 sm:$0xff] %v982
    %s999 = scalar_lea.vmem [#allocation1], 3
    %1000 = vst [vmem:[%s999] ss:$9 sm:$0xff] %v983
    %s1001 = scalar_lea.vmem [#allocation1], 4
    %1002 = vst [vmem:[%s1001] ss:$9 sm:$0xff] %v984
    %s1003 = scalar_lea.vmem [#allocation1], 5
    %1004 = vst [vmem:[%s1003] ss:$9 sm:$0xff] %v960
    %s1005 = scalar_lea.vmem [#allocation1], 6
    %1006 = vst [vmem:[%s1005] ss:$9 sm:$0xff] %v985
    %s1007 = scalar_lea.vmem [#allocation1], 7
    %1008 = vst [vmem:[%s1007] ss:$9 sm:$0xff] %v986
    %v1009 = vld [vmem:[#allocation1] sm:$0xff]
    %1010 = vst [vmem:[#allocation1] ss:$9 sm:$0xff] %v987
    %1011 = vst [vmem:[%s995] ss:$9 sm:$0xff] %v988
    %v1012 = vld [vmem:[#allocation1] sm:$0xff]
    %1015 = vst [vmem:[#allocation1] ss:$9 sm:$0xff] %v978
    %s1016 = scalar_lea.vmem [#allocation1], 1
    %1017 = vst [vmem:[%s1016] ss:$9 sm:$0xff] %v990
    %s1018 = scalar_lea.vmem [#allocation1], 2
    %1019 = vst [vmem:[%s1018] ss:$9 sm:$0xff] %v991
    %s1020 = scalar_lea.vmem [#allocation1], 3
    %1021 = vst [vmem:[%s1020] ss:$9 sm:$0xff] %v992
    %s1022 = scalar_lea.vmem [#allocation1], 4
    %1023 = vst [vmem:[%s1022] ss:$9 sm:$0xff] %v993
    %s1024 = scalar_lea.vmem [#allocation1], 5
    %1025 = vst [vmem:[%s1024] ss:$9 sm:$0xff] %v978
    %s1026 = scalar_lea.vmem [#allocation1], 6
    %1027 = vst [vmem:[%s1026] ss:$9 sm:$0xff] %v990
    %s1028 = scalar_lea.vmem [#allocation1], 7
    %1029 = vst [vmem:[%s1028] ss:$9 sm:$0xff] %v991
    %v1030 = vld [vmem:[#allocation1] sm:$0xff]
    %1031 = vst [vmem:[#allocation1] ss:$9 sm:$0xff] %v992
    %1032 = vst [vmem:[%s1016] ss:$9 sm:$0xff] %v993
    %v1033 = vld [vmem:[#allocation1] sm:$0xff]
    %1036 = vmatpush.msra.mxu0 %v976
    %1037 = vmatpush.msra.mxu0 %v975
    %1038 = vmatpush.msra.mxu0 %v974
    %1039 = vmatpush.msra.mxu0 %v973
    %1040 = vmatpush.msra.mxu0 %v972
    %1041 = vmatpush.msra.mxu0 %v971
    %1042 = vmatpush.msra.mxu0 %v970
    %1043 = vmatpush.msra.mxu0 %v969
    %1044 = vmatpush.msra.mxu0 %v968
    %1045 = vmatpush.msra.mxu0 %v967
    %1046 = vmatpush.msra.mxu0 %v966
    %1047 = vmatpush.msra.mxu0 %v965
    %1048 = vmatpush.msra.mxu0 %v964
    %1049 = vmatpush.msra.mxu0 %v963
    %1050 = vmatpush.msra.mxu0 %v962
    %1051 = vmatpush.msra.mxu0 %v961
    %1052 = vmatmul.f32.gmra.mxu0 %v1009
    %v1053 = vpop.f32.mrf.mxu0
    %v1054 = vadd.f32 %v1030, %v1053
    %1055 = vmatmul.f32.gmra.mxu0 %v1012
    %v1056 = vpop.f32.mrf.mxu0
    %v1057 = vadd.f32 %v1033, %v1056
    %1058 = vdwg.mxu0
    %v1061 = vrot.slane %v1054, 1
    %v1062 = vrot.slane %v1054, 2
    %v1063 = vrot.slane %v1054, 3
    %v1064 = vrot.slane %v1054, 4
    %v1065 = vrot.slane %v1054, 5
    %v1066 = vrot.slane %v1054, 6
    %v1067 = vrot.slane %v1054, 7
    %v1068 = vrot.slane %v1057, 1
    %1069 = vst [vmem:[#allocation1] ss:$9 sm:$0xff] %v1054
    %s1070 = scalar_lea.vmem [#allocation1], 1
    %1071 = vst [vmem:[%s1070] ss:$9 sm:$0xff] %v1061
    %s1072 = scalar_lea.vmem [#allocation1], 2
    %1073 = vst [vmem:[%s1072] ss:$9 sm:$0xff] %v1062
    %s1074 = scalar_lea.vmem [#allocation1], 3
    %1075 = vst [vmem:[%s1074] ss:$9 sm:$0xff] %v1063
    %s1076 = scalar_lea.vmem [#allocation1], 4
    %1077 = vst [vmem:[%s1076] ss:$9 sm:$0xff] %v1064
    %v1078 = vld [vmem:[#allocation1] sm:$0xff]
    %1079 = vst [vmem:[#allocation1] ss:$9 sm:$0xff] %v1065
    %1080 = vst [vmem:[%s1070] ss:$9 sm:$0xff] %v1066
    %1081 = vst [vmem:[%s1072] ss:$9 sm:$0xff] %v1067
    %1082 = vst [vmem:[%s1074] ss:$9 sm:$0xff] %v1057
    %1083 = vst [vmem:[%s1076] ss:$9 sm:$0xff] %v1068
    %v1084 = vld [vmem:[#allocation1] sm:$0xff]
    %vm1087 = vcmask 28672
    %v1088 = vsel %vm1087, %v1078, -inf
    %v1089 = vrot.slane %v1088, 4
    %v1090 = vmax.f32 %v1088, %v1089
    %v1091 = vrot.slane %v1090, 2
    %v1092 = vmax.f32 %v1090, %v1091
    %v1093 = vrot.slane %v1092, 1
    %v1094 = vmax.f32 %v1092, %v1093
    %v1095 = vsel %vm1087, %v1084, -inf
    %v1096 = vrot.slane %v1095, 4
    %v1097 = vmax.f32 %v1095, %v1096
    %v1098 = vrot.slane %v1097, 2
    %v1099 = vmax.f32 %v1097, %v1098
    %v1100 = vrot.slane %v1099, 1
    %v1101 = vmax.f32 %v1099, %v1100
    %v1102 = vmax.f32 %v1094, 0.0
    %v1103 = vmax.f32 %v1101, 0.0
    %v1104 = vld [vmem:[#allocation2 + $0x200] sm:$0xf]
    %v1107 = vsel %vm764, %v1103, %v1102
    %v1108 = vsel %vm766, %v1107, 0
    %v1111 = vsel %vm769, %v1104, 0
    %1113 = vmatpush.msra.mxu0 0.0
    %1114 = vmatpush.msra.mxu0 0.0
    %1115 = vmatpush.msra.mxu0 0.0
    %1116 = vmatpush.msra.mxu0 0.0
    %1117 = vmatpush.msra.mxu0 0.0
    %1118 = vmatpush.msra.mxu0 0.0
    %1119 = vmatpush.msra.mxu0 0.0
    %1120 = vmatpush.msra.mxu0 0.0
    %1121 = vmatpush.msra.mxu0 0.0
    %1122 = vmatpush.msra.mxu0 0.0
    %1123 = vmatpush.msra.mxu0 0.0
    %1124 = vmatpush.msra.mxu0 0.0
    %1125 = vmatpush.msra.mxu0 0.0
    %1126 = vmatpush.msra.mxu0 0.0
    %1127 = vmatpush.msra.mxu0 0.0
    %1128 = vmatpush.msra.mxu0 %v1111
    %1129 = vmatmul.f32.gmra.mxu0 %v1108
    %v1130 = vpop.f32.mrf.mxu0
    %v1131 = vadd.f32 0.0, %v1130
    %1132 = vdwg.mxu0
    %v1133 = vadd.f32 %v950, %v1131
    %1134 = vst [vmem:[#allocation7] sm:$0x3] %v1133
    // Predicated region
    $region26: #{model_forward.1} parent=1 // pred_check
      _
    $region27: #{model_forward.1} parent=1 // pred_check_branch
      %1136 = sbr.rel (0) target = $region29
    $region28: #{model_forward.1} parent=1 // pred_region
      %1138 = vsyncadd [#allocation4], 0
      %s1140 = sshll.u32 [#allocation7], 4
      %s1141 = int_to_ptr.vmem [resolvable:$true] %s1140
      %s1142 = sshll.u32 %s4, 4
      %s1143 = int_to_ptr.hbm [resolvable:$true] %s1142
      %1145 = dma.vmem_to_hbm [thread:$0]  %s1141, 32, %s1143, [#allocation4]
    $region29: #{model_forward.1} parent=1 // pred_fallthru
      _
    // Predicated region
    $region30: #{model_forward.1} parent=1 // pred_check
      _
    $region31: #{model_forward.1} parent=1 // pred_check_branch
      %1147 = sbr.rel (0) target = $region33
    $region32: #{model_forward.1} parent=1 // pred_region
      %1149 = dma.done [#allocation4], 32
    $region33: #{model_forward.1} parent=1 // pred_fallthru
      _
    %1150 = vsyncpa [#allocation3], 1
    %1151 = vsyncpa [#allocation6], 1
    %1152 = vsyncpa [#allocation4], 1

</llo_original>
